<compile_context>
chip_gen: v7x
topology: tpu7x:2x2x1
jax: 0.10.0
libtpu: 0.0.40
codegen_flags: <defaults>
</compile_context>

<pallas_src>
import jax
import jax.numpy as jnp
from jax.experimental import pallas as pl
from jax.experimental.pallas import tpu as pltpu

# ----------------------- config (small, synthetic) --------------------------
INPUT_Z_DIM = 16
G_DIM = 32
OUTPUT_HEIGHT = 8
OUTPUT_WIDTH = 8
OUTPUT_CHANNEL = 1
OUT_DIM = OUTPUT_HEIGHT * OUTPUT_WIDTH * OUTPUT_CHANNEL   # 64
BATCH = 256                                               # fills 256-row MXU M dim

PAD = 128          # lane-dense width every feature dim is padded to
BN_EPS = 1e-5
LEAKY_SLOPE = 0.2


# ------------------------------- kernel -------------------------------------
def generator_kernel(x_ref, w_ref, vec_ref, o_ref):
    """Fused 4-layer MLP generator.

    x_ref:   (B, 128) f32, z in lanes [:Z], zeros elsewhere.
    w_ref:   (4, 128, 128) bf16, layer weights pre-transposed to (din, dout)
             and zero-padded (padding is exact: zero columns stay zero).
    vec_ref: (8, 128) f32 rows: 0:g1 1:be1 2:g2 3:be2 4:g3 5:be3 6:b4 7:unused.
    o_ref:   (B, 128) f32, tanh output in lanes [:OUT_DIM].
    """
    x = x_ref[...]
    vecs = vec_ref[...]
    b = x.shape[0]
    # Row of 1/B: batch reductions become a single (1,B)@(B,2F) MXU matmul,
    # keeping cross-sublane XLU reductions off the critical path.
    inv_b_row = jnp.full((1, b), 1.0 / b, dtype=jnp.float32)

    def bn_leaky(h, gamma, beta):
        # Training-mode BatchNorm1d (biased variance) + LeakyReLU(0.2).
        # One MXU pass computes E[h] and E[h^2] together; var = E[h^2]-mean^2.
        hh = jnp.concatenate([h, h * h], axis=1)                              # (B, 2F)
        stats = jnp.dot(inv_b_row, hh, preferred_element_type=jnp.float32)    # (1, 2F)
        mean = stats[:, :PAD]
        ex2 = stats[:, PAD:]
        var = ex2 - mean * mean
        scale = gamma * jax.lax.rsqrt(var + BN_EPS)                           # fused affine
        y = (h - mean) * scale + beta
        return jnp.where(y > 0, y, LEAKY_SLOPE * y)

    # bf16 operands at the MXU boundary only; accumulation / elementwise in f32.
    h = jnp.dot(x.astype(jnp.bfloat16), w_ref[0],
                preferred_element_type=jnp.float32)        # bias cancelled by BN
    h = bn_leaky(h, vecs[0:1, :], vecs[1:2, :])

    h = jnp.dot(h.astype(jnp.bfloat16), w_ref[1], preferred_element_type=jnp.float32)
    h = bn_leaky(h, vecs[2:3, :], vecs[3:4, :])

    h = jnp.dot(h.astype(jnp.bfloat16), w_ref[2], preferred_element_type=jnp.float32)
    h = bn_leaky(h, vecs[4:5, :], vecs[5:6, :])

    h = jnp.dot(h.astype(jnp.bfloat16), w_ref[3],
                preferred_element_type=jnp.float32) + vecs[6:7, :]
    o_ref[...] = jnp.tanh(h)                               # lane-dense (B,128) store


# --------------------------- one-time param packing ---------------------------
def _pad2d(a, rows, cols):
    return jnp.pad(a, ((0, rows - a.shape[0]), (0, cols - a.shape[1])))


def _pad1d(v, width, fill):
    return jnp.pad(v, (0, width - v.shape[0]), constant_values=fill)


def pack_params(params):
    """One-time repack of PyTorch-shaped params into kernel-ready slabs.

    Call this OUTSIDE the hot path (results are reused across forward calls).
    Zero padding is exact: padded activation columns stay identically zero and
    feed zero weight rows downstream; gamma pads with 1.0 / beta with 0.0 so
    padded BN columns map 0 -> 0.
    """
    w_slab = jnp.stack([
        _pad2d(params["w1"].T, PAD, PAD),   # (Z, G)   -> (128, 128)
        _pad2d(params["w2"].T, PAD, PAD),   # (G, 2G)  -> (128, 128)
        _pad2d(params["w3"].T, PAD, PAD),   # (2G, 4G) -> (128, 128)
        _pad2d(params["w4"].T, PAD, PAD),   # (4G, HWC)-> (128, 128)
    ]).astype(jnp.bfloat16)                 # single (4, 128, 128) bf16 slab
    # b1..b3 intentionally dropped: training-mode BN cancels additive biases.
    vec_slab = jnp.stack([
        _pad1d(params["g1"], PAD, 1.0), _pad1d(params["be1"], PAD, 0.0),
        _pad1d(params["g2"], PAD, 1.0), _pad1d(params["be2"], PAD, 0.0),
        _pad1d(params["g3"], PAD, 1.0), _pad1d(params["be3"], PAD, 0.0),
        _pad1d(params["b4"], PAD, 0.0), jnp.zeros((PAD,), jnp.float32),
    ])                                      # single (8, 128) f32 slab
    return w_slab, vec_slab


def pad_input(z):
    """(B, Z) f32 noise -> lane-dense (B, 128) f32 (do once per batch of noise)."""
    return jnp.pad(z, ((0, 0), (0, PAD - z.shape[1])))


# ------------------------------- hot-path forward -----------------------------
@jax.jit
def generator_forward(x_padded, w_slab, vec_slab):
    """x_padded: (B, 128) f32 -> padded (B, 128) f32 output (cols [:OUT_DIM] valid)."""
    vmem = pl.BlockSpec(memory_space=pltpu.MemorySpace.VMEM)
    return pl.pallas_call(
        generator_kernel,
        out_shape=jax.ShapeDtypeStruct((x_padded.shape[0], PAD), jnp.float32),
        in_specs=[vmem, vmem, vmem],
        out_specs=vmem,
    )(x_padded, w_slab, vec_slab)


# ------------------------ parameters & pure-JAX reference --------------------
def init_params(key):
    """PyTorch-shaped parameters (Linear: (dout, din) weight, (dout,) bias).

    BN gamma/beta are randomly perturbed from their PyTorch defaults (1, 0) so
    the fused-affine path in the kernel is actually exercised.
    """
    specs = [
        ("1", G_DIM, INPUT_Z_DIM, True),
        ("2", G_DIM * 2, G_DIM, True),
        ("3", G_DIM * 4, G_DIM * 2, True),
        ("4", OUT_DIM, G_DIM * 4, False),
    ]
    params = {}
    for name, dout, din, has_bn in specs:
        key, kw, kb, kg, ke = jax.random.split(key, 5)
        bound = din ** -0.5
        params[f"w{name}"] = jax.random.uniform(kw, (dout, din), jnp.float32, -bound, bound)
        params[f"b{name}"] = jax.random.uniform(kb, (dout,), jnp.float32, -bound, bound)
        if has_bn:
            params[f"g{name}"] = 1.0 + 0.1 * jax.random.normal(kg, (dout,), jnp.float32)
            params[f"be{name}"] = 0.1 * jax.random.normal(ke, (dout,), jnp.float32)
    return params


def reference_forward(x, params):
    """Pure-JAX f32 reference of the PyTorch module (training-mode BN, all biases)."""
    hp = jax.lax.Precision.HIGHEST

    def bn_leaky(h, g, b):
        m = jnp.mean(h, axis=0, keepdims=True)
        v = jnp.mean((h - m) ** 2, axis=0, keepdims=True)
        h = (h - m) * jax.lax.rsqrt(v + BN_EPS) * g + b
        return jnp.where(h > 0, h, LEAKY_SLOPE * h)

    h = jnp.dot(x, params["w1"].T, precision=hp) + params["b1"]
    h = bn_leaky(h, params["g1"], params["be1"])
    h = jnp.dot(h, params["w2"].T, precision=hp) + params["b2"]
    h = bn_leaky(h, params["g2"], params["be2"])
    h = jnp.dot(h, params["w3"].T, precision=hp) + params["b3"]
    h = bn_leaky(h, params["g3"], params["be3"])
    h = jnp.dot(h, params["w4"].T, precision=hp) + params["b4"]
    return jnp.tanh(h)


if __name__ == "__main__":
    key = jax.random.PRNGKey(0)
    kx, kp = jax.random.split(key)
    z = jax.random.normal(kx, (BATCH, INPUT_Z_DIM), jnp.float32)
    params = init_params(kp)

    # One-time packing (outside the hot path).
    w_slab, vec_slab = pack_params(params)
    x_padded = pad_input(z)

    out_padded = generator_forward(x_padded, w_slab, vec_slab)
    out_padded = jax.block_until_ready(out_padded)
    out = out_padded[:, :OUT_DIM]   # slice outside the jitted hot path

    assert out.shape == (BATCH, OUT_DIM), out.shape
    assert bool(jnp.all(jnp.isfinite(out)))
    assert bool(jnp.all(jnp.abs(out) <= 1.0))  # tanh range
    # Padded lanes must stay identically zero through the whole network.
    assert float(jnp.max(jnp.abs(out_padded[:, OUT_DIM:]))) == 0.0

    # Numerical check vs. full-precision reference (also proves bias
    # cancellation and exact lane padding).  Bound is loose because the kernel
    # intentionally uses bf16 MXU operands.
    ref = reference_forward(z, params)
    max_err = float(jnp.max(jnp.abs(out - ref)))
    assert max_err < 1e-1, max_err

    print("KERNEL_OK")
</pallas_src>

<mosaic_0001>
module attributes {stable_mosaic.version = 11 : i64} {
  func.func @generator_kernel(%arg0: memref<256x128xf32, #tpu.memory_space<vmem>>, %arg1: memref<4x128x128xbf16, #tpu.memory_space<vmem>>, %arg2: memref<8x128xf32, #tpu.memory_space<vmem>>, %arg3: memref<256x128xf32, #tpu.memory_space<vmem>>) attributes {dimension_semantics = [], scalar_prefetch = 0 : i64, scratch_operands = 0 : i64, tpu.core_type = #tpu.core_type<tc>} {
    %c0 = arith.constant 0 : index
    %c0_0 = arith.constant 0 : index
    %0 = vector.load %arg0[%c0, %c0_0] : memref<256x128xf32, #tpu.memory_space<vmem>>, vector<256x128xf32>
    %c0_1 = arith.constant 0 : index
    %c0_2 = arith.constant 0 : index
    %1 = vector.load %arg2[%c0_1, %c0_2] : memref<8x128xf32, #tpu.memory_space<vmem>>, vector<8x128xf32>
    %cst = arith.constant 3.906250e-03 : f32
    %2 = vector.broadcast %cst : f32 to vector<1x256xf32>
    %3 = arith.truncf %0 : vector<256x128xf32> to vector<256x128xbf16>
    %c0_3 = arith.constant 0 : index
    %c0_4 = arith.constant 0 : index
    %c0_5 = arith.constant 0 : index
    %4 = vector.load %arg1[%c0_3, %c0_4, %c0_5] : memref<4x128x128xbf16, #tpu.memory_space<vmem>>, vector<1x128x128xbf16>
    %5 = vector.shape_cast %4 : vector<1x128x128xbf16> to vector<128x128xbf16>
    %cst_6 = arith.constant dense<0.000000e+00> : vector<256x128xf32>
    %6 = tpu.matmul %3, %5, %cst_6 {dimension_numbers = #tpu.dot_dimension_numbers<[1], [0], [0], [1], [0, 0, 1, 1], [], []>} : vector<256x128xbf16>, vector<128x128xbf16>, vector<256x128xf32> -> vector<256x128xf32>
    %7 = vector.extract_strided_slice %1 {offsets = [0, 0], sizes = [1, 128], strides = [1, 1]} : vector<8x128xf32> to vector<1x128xf32>
    %8 = vector.extract_strided_slice %1 {offsets = [1, 0], sizes = [1, 128], strides = [1, 1]} : vector<8x128xf32> to vector<1x128xf32>
    %9 = arith.mulf %6, %6 : vector<256x128xf32>
    %10 = tpu.concatenate %6, %9 in 1 : vector<256x128xf32>, vector<256x128xf32> -> vector<256x256xf32>
    %cst_7 = arith.constant dense<0.000000e+00> : vector<1x256xf32>
    %11 = tpu.matmul %2, %10, %cst_7 {dimension_numbers = #tpu.dot_dimension_numbers<[1], [0], [0], [1], [0, 0, 1, 1], [], []>} : vector<1x256xf32>, vector<256x256xf32>, vector<1x256xf32> -> vector<1x256xf32>
    %12 = vector.extract_strided_slice %11 {offsets = [0, 0], sizes = [1, 128], strides = [1, 1]} : vector<1x256xf32> to vector<1x128xf32>
    %13 = vector.extract_strided_slice %11 {offsets = [0, 128], sizes = [1, 128], strides = [1, 1]} : vector<1x256xf32> to vector<1x128xf32>
    %14 = arith.mulf %12, %12 : vector<1x128xf32>
    %15 = arith.subf %13, %14 : vector<1x128xf32>
    %cst_8 = arith.constant 9.99999974E-6 : f32
    %16 = vector.broadcast %cst_8 : f32 to vector<1x128xf32>
    %17 = arith.addf %15, %16 : vector<1x128xf32>
    %18 = math.rsqrt %17 : vector<1x128xf32>
    %19 = arith.mulf %7, %18 : vector<1x128xf32>
    %20 = vector.broadcast %12 : vector<1x128xf32> to vector<256x128xf32>
    %21 = arith.subf %6, %20 : vector<256x128xf32>
    %22 = vector.broadcast %19 : vector<1x128xf32> to vector<256x128xf32>
    %23 = arith.mulf %21, %22 : vector<256x128xf32>
    %24 = vector.broadcast %8 : vector<1x128xf32> to vector<256x128xf32>
    %25 = arith.addf %23, %24 : vector<256x128xf32>
    %cst_9 = arith.constant 0.000000e+00 : f32
    %26 = vector.broadcast %cst_9 : f32 to vector<256x128xf32>
    %27 = arith.cmpf ogt, %25, %26 : vector<256x128xf32>
    %cst_10 = arith.constant 2.000000e-01 : f32
    %28 = vector.broadcast %cst_10 : f32 to vector<256x128xf32>
    %29 = arith.mulf %28, %25 : vector<256x128xf32>
    %30 = arith.select %27, %25, %29 : vector<256x128xi1>, vector<256x128xf32>
    %31 = arith.truncf %30 : vector<256x128xf32> to vector<256x128xbf16>
    %c1 = arith.constant 1 : index
    %c0_11 = arith.constant 0 : index
    %c0_12 = arith.constant 0 : index
    %32 = vector.load %arg1[%c1, %c0_11, %c0_12] : memref<4x128x128xbf16, #tpu.memory_space<vmem>>, vector<1x128x128xbf16>
    %33 = vector.shape_cast %32 : vector<1x128x128xbf16> to vector<128x128xbf16>
    %cst_13 = arith.constant dense<0.000000e+00> : vector<256x128xf32>
    %34 = tpu.matmul %31, %33, %cst_13 {dimension_numbers = #tpu.dot_dimension_numbers<[1], [0], [0], [1], [0, 0, 1, 1], [], []>} : vector<256x128xbf16>, vector<128x128xbf16>, vector<256x128xf32> -> vector<256x128xf32>
    %35 = vector.extract_strided_slice %1 {offsets = [2, 0], sizes = [1, 128], strides = [1, 1]} : vector<8x128xf32> to vector<1x128xf32>
    %36 = vector.extract_strided_slice %1 {offsets = [3, 0], sizes = [1, 128], strides = [1, 1]} : vector<8x128xf32> to vector<1x128xf32>
    %37 = arith.mulf %34, %34 : vector<256x128xf32>
    %38 = tpu.concatenate %34, %37 in 1 : vector<256x128xf32>, vector<256x128xf32> -> vector<256x256xf32>
    %cst_14 = arith.constant dense<0.000000e+00> : vector<1x256xf32>
    %39 = tpu.matmul %2, %38, %cst_14 {dimension_numbers = #tpu.dot_dimension_numbers<[1], [0], [0], [1], [0, 0, 1, 1], [], []>} : vector<1x256xf32>, vector<256x256xf32>, vector<1x256xf32> -> vector<1x256xf32>
    %40 = vector.extract_strided_slice %39 {offsets = [0, 0], sizes = [1, 128], strides = [1, 1]} : vector<1x256xf32> to vector<1x128xf32>
    %41 = vector.extract_strided_slice %39 {offsets = [0, 128], sizes = [1, 128], strides = [1, 1]} : vector<1x256xf32> to vector<1x128xf32>
    %42 = arith.mulf %40, %40 : vector<1x128xf32>
    %43 = arith.subf %41, %42 : vector<1x128xf32>
    %cst_15 = arith.constant 9.99999974E-6 : f32
    %44 = vector.broadcast %cst_15 : f32 to vector<1x128xf32>
    %45 = arith.addf %43, %44 : vector<1x128xf32>
    %46 = math.rsqrt %45 : vector<1x128xf32>
    %47 = arith.mulf %35, %46 : vector<1x128xf32>
    %48 = vector.broadcast %40 : vector<1x128xf32> to vector<256x128xf32>
    %49 = arith.subf %34, %48 : vector<256x128xf32>
    %50 = vector.broadcast %47 : vector<1x128xf32> to vector<256x128xf32>
    %51 = arith.mulf %49, %50 : vector<256x128xf32>
    %52 = vector.broadcast %36 : vector<1x128xf32> to vector<256x128xf32>
    %53 = arith.addf %51, %52 : vector<256x128xf32>
    %cst_16 = arith.constant 0.000000e+00 : f32
    %54 = vector.broadcast %cst_16 : f32 to vector<256x128xf32>
    %55 = arith.cmpf ogt, %53, %54 : vector<256x128xf32>
    %cst_17 = arith.constant 2.000000e-01 : f32
    %56 = vector.broadcast %cst_17 : f32 to vector<256x128xf32>
    %57 = arith.mulf %56, %53 : vector<256x128xf32>
    %58 = arith.select %55, %53, %57 : vector<256x128xi1>, vector<256x128xf32>
    %59 = arith.truncf %58 : vector<256x128xf32> to vector<256x128xbf16>
    %c2 = arith.constant 2 : index
    %c0_18 = arith.constant 0 : index
    %c0_19 = arith.constant 0 : index
    %60 = vector.load %arg1[%c2, %c0_18, %c0_19] : memref<4x128x128xbf16, #tpu.memory_space<vmem>>, vector<1x128x128xbf16>
    %61 = vector.shape_cast %60 : vector<1x128x128xbf16> to vector<128x128xbf16>
    %cst_20 = arith.constant dense<0.000000e+00> : vector<256x128xf32>
    %62 = tpu.matmul %59, %61, %cst_20 {dimension_numbers = #tpu.dot_dimension_numbers<[1], [0], [0], [1], [0, 0, 1, 1], [], []>} : vector<256x128xbf16>, vector<128x128xbf16>, vector<256x128xf32> -> vector<256x128xf32>
    %63 = vector.extract_strided_slice %1 {offsets = [4, 0], sizes = [1, 128], strides = [1, 1]} : vector<8x128xf32> to vector<1x128xf32>
    %64 = vector.extract_strided_slice %1 {offsets = [5, 0], sizes = [1, 128], strides = [1, 1]} : vector<8x128xf32> to vector<1x128xf32>
    %65 = arith.mulf %62, %62 : vector<256x128xf32>
    %66 = tpu.concatenate %62, %65 in 1 : vector<256x128xf32>, vector<256x128xf32> -> vector<256x256xf32>
    %cst_21 = arith.constant dense<0.000000e+00> : vector<1x256xf32>
    %67 = tpu.matmul %2, %66, %cst_21 {dimension_numbers = #tpu.dot_dimension_numbers<[1], [0], [0], [1], [0, 0, 1, 1], [], []>} : vector<1x256xf32>, vector<256x256xf32>, vector<1x256xf32> -> vector<1x256xf32>
    %68 = vector.extract_strided_slice %67 {offsets = [0, 0], sizes = [1, 128], strides = [1, 1]} : vector<1x256xf32> to vector<1x128xf32>
    %69 = vector.extract_strided_slice %67 {offsets = [0, 128], sizes = [1, 128], strides = [1, 1]} : vector<1x256xf32> to vector<1x128xf32>
    %70 = arith.mulf %68, %68 : vector<1x128xf32>
    %71 = arith.subf %69, %70 : vector<1x128xf32>
    %cst_22 = arith.constant 9.99999974E-6 : f32
    %72 = vector.broadcast %cst_22 : f32 to vector<1x128xf32>
    %73 = arith.addf %71, %72 : vector<1x128xf32>
    %74 = math.rsqrt %73 : vector<1x128xf32>
    %75 = arith.mulf %63, %74 : vector<1x128xf32>
    %76 = vector.broadcast %68 : vector<1x128xf32> to vector<256x128xf32>
    %77 = arith.subf %62, %76 : vector<256x128xf32>
    %78 = vector.broadcast %75 : vector<1x128xf32> to vector<256x128xf32>
    %79 = arith.mulf %77, %78 : vector<256x128xf32>
    %80 = vector.broadcast %64 : vector<1x128xf32> to vector<256x128xf32>
    %81 = arith.addf %79, %80 : vector<256x128xf32>
    %cst_23 = arith.constant 0.000000e+00 : f32
    %82 = vector.broadcast %cst_23 : f32 to vector<256x128xf32>
    %83 = arith.cmpf ogt, %81, %82 : vector<256x128xf32>
    %cst_24 = arith.constant 2.000000e-01 : f32
    %84 = vector.broadcast %cst_24 : f32 to vector<256x128xf32>
    %85 = arith.mulf %84, %81 : vector<256x128xf32>
    %86 = arith.select %83, %81, %85 : vector<256x128xi1>, vector<256x128xf32>
    %87 = arith.truncf %86 : vector<256x128xf32> to vector<256x128xbf16>
    %c3 = arith.constant 3 : index
    %c0_25 = arith.constant 0 : index
    %c0_26 = arith.constant 0 : index
    %88 = vector.load %arg1[%c3, %c0_25, %c0_26] : memref<4x128x128xbf16, #tpu.memory_space<vmem>>, vector<1x128x128xbf16>
    %89 = vector.shape_cast %88 : vector<1x128x128xbf16> to vector<128x128xbf16>
    %cst_27 = arith.constant dense<0.000000e+00> : vector<256x128xf32>
    %90 = tpu.matmul %87, %89, %cst_27 {dimension_numbers = #tpu.dot_dimension_numbers<[1], [0], [0], [1], [0, 0, 1, 1], [], []>} : vector<256x128xbf16>, vector<128x128xbf16>, vector<256x128xf32> -> vector<256x128xf32>
    %91 = vector.extract_strided_slice %1 {offsets = [6, 0], sizes = [1, 128], strides = [1, 1]} : vector<8x128xf32> to vector<1x128xf32>
    %92 = vector.broadcast %91 : vector<1x128xf32> to vector<256x128xf32>
    %93 = arith.addf %90, %92 : vector<256x128xf32>
    %94 = math.tanh %93 : vector<256x128xf32>
    %c0_28 = arith.constant 0 : index
    %c0_29 = arith.constant 0 : index
    %95 = vector.load %arg3[%c0_28, %c0_29] : memref<256x128xf32, #tpu.memory_space<vmem>>, vector<256x128xf32>
    tpu.vector_store %arg3[%c0_28, %c0_29], %94 {strides = array<i32>} : memref<256x128xf32, #tpu.memory_space<vmem>>, vector<256x128xf32>,
    return
  }
}

</mosaic_0001>

<llo_original>
// kernel: generator_forward.1
$region0: #{generator_forward.1}
  #allocation0 [shape = 'u32[]', space=smem, size = 0x4, offset = 0x4, fixed_abs, tag = 'smem constant byte address 0x4 - core index']
  #allocation1 [shape = 'u32[144,128]{1,0:T(1,128)}', space=vmem, size = 0x12000, scoped, tag = 'internal scratch']
  %s0 = inlined_call_operand.hbm [shape: f32[256,128], index: 0, kind: input, shape index: {}]
  %s1 = inlined_call_operand.hbm [shape: bf16[4,128,128], index: 1, kind: input, shape index: {}]
  %s2 = inlined_call_operand.hbm [shape: f32[8,128], index: 2, kind: input, shape index: {}]
  %s3 = inlined_call_operand.hbm [shape: f32[256,128], index: 3, kind: output, shape index: {}]
  %s4 = sld [smem:[#allocation0]]
  $region34: #{generator_forward.1} parent=0
    _
  %s6 = ssub.s32 1, %s4
  %s7 = scalar_select 0, %s6, %s4
  $region1: #{generator_forward.1} parent=0
    #allocation2 [shape = 'u8[131072]{0}', space=vmem, size = 0x20000, scoped, tag = 'input window, operand 0, single buffered']
    #allocation3 [shape = 's32[1]{0}', space=sflag, size = 0x4, scoped, tag = 'scoped memory for generator_forward.1']
    #allocation4 [shape = 's32[1]{0}', space=sflag, size = 0x4, scoped, tag = 'scoped memory for generator_forward.1']
    #allocation5 [shape = 'u8[131072]{0}', space=vmem, size = 0x20000, scoped, tag = 'input window, operand 1, single buffered']
    #allocation6 [shape = 's32[1]{0}', space=sflag, size = 0x4, scoped, tag = 'scoped memory for generator_forward.1']
    #allocation7 [shape = 'u8[4096]{0}', space=vmem, size = 0x1000, scoped, tag = 'input window, operand 2, single buffered']
    #allocation8 [shape = 'u8[131072]{0}', space=vmem, size = 0x20000, scoped, tag = 'output window, operand 0, single buffered']
    %8 = vsyncpa [#allocation3], 0
    %9 = vsyncpa [#allocation6], 0
    %10 = vsyncpa [#allocation4], 0
    // Predicated region
    $region2: #{generator_forward.1} parent=1 // pred_check
      _
    $region3: #{generator_forward.1} parent=1 // pred_check_branch
      %12 = sbr.rel (0) target = $region5
    $region4: #{generator_forward.1} parent=1 // pred_region
      %s14 = ssub.s32 4096, 4096
      %15 = vsyncadd [#allocation3], %s14
      %s16 = sshll.u32 [#allocation2], 4
      %s17 = int_to_ptr.vmem [resolvable:$true] %s16
      %22 = dma.hbm_to_vmem [thread:$0]  %s0, 4096, %s17, [#allocation3], 128, 128, 8
    $region5: #{generator_forward.1} parent=1 // pred_fallthru
      _
    // Predicated region
    $region6: #{generator_forward.1} parent=1 // pred_check
      _
    $region7: #{generator_forward.1} parent=1 // pred_check_branch
      %24 = sbr.rel (0) target = $region9
    $region8: #{generator_forward.1} parent=1 // pred_region
      %s26 = ssub.s32 4096, 4096
      %27 = vsyncadd [#allocation6], %s26
      %s28 = sshll.u32 [#allocation5], 4
      %s29 = int_to_ptr.vmem [resolvable:$true] %s28
      %34 = dma.hbm_to_vmem [thread:$0]  %s1, 4096, %s29, [#allocation6], 64, 64, 4
    $region9: #{generator_forward.1} parent=1 // pred_fallthru
      _
    // Predicated region
    $region10: #{generator_forward.1} parent=1 // pred_check
      _
    $region11: #{generator_forward.1} parent=1 // pred_check_branch
      %36 = sbr.rel (0) target = $region13
    $region12: #{generator_forward.1} parent=1 // pred_region
      %s38 = ssub.s32 128, 128
      %39 = vsyncadd [#allocation6], %s38
      %s41 = sshll.u32 [#allocation7], 4
      %s42 = int_to_ptr.vmem [resolvable:$true] %s41
      %44 = dma.hbm_to_vmem [thread:$0]  %s2, 128, %s42, [#allocation6]
    $region13: #{generator_forward.1} parent=1 // pred_fallthru
      _
    // Predicated region
    $region14: #{generator_forward.1} parent=1 // pred_check
      _
    $region15: #{generator_forward.1} parent=1 // pred_check_branch
      %46 = sbr.rel (0) target = $region17
    $region16: #{generator_forward.1} parent=1 // pred_region
      %47 = dma.done [#allocation3], 4096
    $region17: #{generator_forward.1} parent=1 // pred_fallthru
      _
    // Predicated region
    $region18: #{generator_forward.1} parent=1 // pred_check
      _
    $region19: #{generator_forward.1} parent=1 // pred_check_branch
      %49 = sbr.rel (0) target = $region21
    $region20: #{generator_forward.1} parent=1 // pred_region
      %50 = dma.done [#allocation6], 4096
    $region21: #{generator_forward.1} parent=1 // pred_fallthru
      _
    // Predicated region
    $region22: #{generator_forward.1} parent=1 // pred_check
      _
    $region23: #{generator_forward.1} parent=1 // pred_check_branch
      %52 = sbr.rel (0) target = $region25
    $region24: #{generator_forward.1} parent=1 // pred_region
      %53 = dma.done [#allocation6], 128
    $region25: #{generator_forward.1} parent=1 // pred_fallthru
      _
    %v55 = vld [vmem:[#allocation2] sm:$0xff]
    %v56 = vld [vmem:[#allocation2 + $0x8] sm:$0xff]
    %v57 = vld [vmem:[#allocation2 + $0x10] sm:$0xff]
    %v58 = vld [vmem:[#allocation2 + $0x18] sm:$0xff]
    %v59 = vld [vmem:[#allocation2 + $0x20] sm:$0xff]
    %v60 = vld [vmem:[#allocation2 + $0x28] sm:$0xff]
    %v61 = vld [vmem:[#allocation2 + $0x30] sm:$0xff]
    %v62 = vld [vmem:[#allocation2 + $0x38] sm:$0xff]
    %v63 = vld [vmem:[#allocation2 + $0x40] sm:$0xff]
    %v64 = vld [vmem:[#allocation2 + $0x48] sm:$0xff]
    %v65 = vld [vmem:[#allocation2 + $0x50] sm:$0xff]
    %v66 = vld [vmem:[#allocation2 + $0x58] sm:$0xff]
    %v67 = vld [vmem:[#allocation2 + $0x60] sm:$0xff]
    %v68 = vld [vmem:[#allocation2 + $0x68] sm:$0xff]
    %v69 = vld [vmem:[#allocation2 + $0x70] sm:$0xff]
    %v70 = vld [vmem:[#allocation2 + $0x78] sm:$0xff]
    %v71 = vld [vmem:[#allocation2 + $0x80] sm:$0xff]
    %v72 = vld [vmem:[#allocation2 + $0x88] sm:$0xff]
    %v73 = vld [vmem:[#allocation2 + $0x90] sm:$0xff]
    %v74 = vld [vmem:[#allocation2 + $0x98] sm:$0xff]
    %v75 = vld [vmem:[#allocation2 + $0xa0] sm:$0xff]
    %v76 = vld [vmem:[#allocation2 + $0xa8] sm:$0xff]
    %v77 = vld [vmem:[#allocation2 + $0xb0] sm:$0xff]
    %v78 = vld [vmem:[#allocation2 + $0xb8] sm:$0xff]
    %v79 = vld [vmem:[#allocation2 + $0xc0] sm:$0xff]
    %v80 = vld [vmem:[#allocation2 + $0xc8] sm:$0xff]
    %v81 = vld [vmem:[#allocation2 + $0xd0] sm:$0xff]
    %v82 = vld [vmem:[#allocation2 + $0xd8] sm:$0xff]
    %v83 = vld [vmem:[#allocation2 + $0xe0] sm:$0xff]
    %v84 = vld [vmem:[#allocation2 + $0xe8] sm:$0xff]
    %v85 = vld [vmem:[#allocation2 + $0xf0] sm:$0xff]
    %v86 = vld [vmem:[#allocation2 + $0xf8] sm:$0xff]
    %v87 = vld [vmem:[#allocation7] sm:$0xff]
    %v88 = vpack.c.bf16 %v56, %v55
    %v89 = vpack.c.bf16 %v58, %v57
    %v90 = vpack.c.bf16 %v60, %v59
    %v91 = vpack.c.bf16 %v62, %v61
    %v92 = vpack.c.bf16 %v64, %v63
    %v93 = vpack.c.bf16 %v66, %v65
    %v94 = vpack.c.bf16 %v68, %v67
    %v95 = vpack.c.bf16 %v70, %v69
    %v96 = vpack.c.bf16 %v72, %v71
    %v97 = vpack.c.bf16 %v74, %v73
    %v98 = vpack.c.bf16 %v76, %v75
    %v99 = vpack.c.bf16 %v78, %v77
    %v100 = vpack.c.bf16 %v80, %v79
    %v101 = vpack.c.bf16 %v82, %v81
    %v102 = vpack.c.bf16 %v84, %v83
    %v103 = vpack.c.bf16 %v86, %v85
    %v104 = vld [vmem:[#allocation5] sm:$0xf]
    %v105 = vld [vmem:[#allocation5 + $0x4] sm:$0xf]
    %v106 = vld [vmem:[#allocation5 + $0x8] sm:$0xf]
    %v107 = vld [vmem:[#allocation5 + $0xc] sm:$0xf]
    %v108 = vld [vmem:[#allocation5 + $0x10] sm:$0xf]
    %v109 = vld [vmem:[#allocation5 + $0x14] sm:$0xf]
    %v110 = vld [vmem:[#allocation5 + $0x18] sm:$0xf]
    %v111 = vld [vmem:[#allocation5 + $0x1c] sm:$0xf]
    %v112 = vld [vmem:[#allocation5 + $0x20] sm:$0xf]
    %v113 = vld [vmem:[#allocation5 + $0x24] sm:$0xf]
    %v114 = vld [vmem:[#allocation5 + $0x28] sm:$0xf]
    %v115 = vld [vmem:[#allocation5 + $0x2c] sm:$0xf]
    %v116 = vld [vmem:[#allocation5 + $0x30] sm:$0xf]
    %v117 = vld [vmem:[#allocation5 + $0x34] sm:$0xf]
    %v118 = vld [vmem:[#allocation5 + $0x38] sm:$0xf]
    %v119 = vld [vmem:[#allocation5 + $0x3c] sm:$0xf]
    %v136 = vunpack.c.l.b16 %v104
    %v137 = vunpack.c.l.b16 %v105
    %v138 = vunpack.c.l.b16 %v106
    %v139 = vunpack.c.l.b16 %v107
    %v140 = vunpack.c.l.b16 %v108
    %v141 = vunpack.c.l.b16 %v109
    %v142 = vunpack.c.l.b16 %v110
    %v143 = vunpack.c.l.b16 %v111
    %v144 = vunpack.c.l.b16 %v112
    %v145 = vunpack.c.l.b16 %v113
    %v146 = vunpack.c.l.b16 %v114
    %v147 = vunpack.c.l.b16 %v115
    %v148 = vunpack.c.l.b16 %v116
    %v149 = vunpack.c.l.b16 %v117
    %v150 = vunpack.c.l.b16 %v118
    %v151 = vunpack.c.l.b16 %v119
    %v152 = vpack.c.b16 %v137, %v136
    %v153 = vpack.c.b16 %v139, %v138
    %v154 = vpack.c.b16 %v141, %v140
    %v155 = vpack.c.b16 %v143, %v142
    %v156 = vpack.c.b16 %v145, %v144
    %v157 = vpack.c.b16 %v147, %v146
    %v158 = vpack.c.b16 %v149, %v148
    %v159 = vpack.c.b16 %v151, %v150
    %168 = vmatprep.subr.bf16.mxu0 0
    %169 = vmatpush1.bf16.msra.mxu0 %v152
    %170 = vmatprep.subr.bf16.mxu0 0
    %171 = vmatpush1.bf16.msra.mxu0 %v153
    %172 = vmatprep.subr.bf16.mxu0 0
    %173 = vmatpush1.bf16.msra.mxu0 %v154
    %174 = vmatprep.subr.bf16.mxu0 0
    %175 = vmatpush1.bf16.msra.mxu0 %v155
    %176 = vmatprep.subr.bf16.mxu0 0
    %177 = vmatpush1.bf16.msra.mxu0 %v156
    %178 = vmatprep.subr.bf16.mxu0 0
    %179 = vmatpush1.bf16.msra.mxu0 %v157
    %180 = vmatprep.subr.bf16.mxu0 0
    %181 = vmatpush1.bf16.msra.mxu0 %v158
    %182 = vmatprep.subr.bf16.mxu0 0
    %183 = vmatpush1.bf16.msra.mxu0 %v159
    %184 = vmatprep.subr.bf16.mxu0 0
    %185 = vmatpush1.bf16.msra.mxu0 0
    %186 = vmatprep.subr.bf16.mxu0 0
    %187 = vmatpush1.bf16.msra.mxu0 0
    %188 = vmatprep.subr.bf16.mxu0 0
    %189 = vmatpush1.bf16.msra.mxu0 0
    %190 = vmatprep.subr.bf16.mxu0 0
    %191 = vmatpush1.bf16.msra.mxu0 0
    %192 = vmatprep.subr.bf16.mxu0 0
    %193 = vmatpush1.bf16.msra.mxu0 0
    %194 = vmatprep.subr.bf16.mxu0 0
    %195 = vmatpush1.bf16.msra.mxu0 0
    %196 = vmatprep.subr.bf16.mxu0 0
    %197 = vmatpush1.bf16.msra.mxu0 0
    %198 = vmatprep.subr.bf16.mxu0 0
    %199 = vmatpush1.bf16.msra.mxu0 0
    %200 = vmatprep.mubr.bf16.mxu0 0
    %201 = vmatmul.mubr.bf16.gmra.mrb[0].mxu0 %v88
    %v202 = vpop.f32.mrb[0].mxu0
    %v203 = vadd.f32 0.0, %v202
    %v204 = vpop.f32.mrb[0].mxu0
    %v205 = vpop.f32.mrb[0].mxu0
    %v206 = vadd.f32 0.0, %v205
    %v207 = vpop.f32.mrb[0].mxu0
    %208 = vmatprep.mubr.bf16.mxu0 0
    %209 = vmatmul.mubr.bf16.gmra.mrb[0].mxu0 %v89
    %v210 = vpop.f32.mrb[0].mxu0
    %v211 = vadd.f32 0.0, %v210
    %v212 = vpop.f32.mrb[0].mxu0
    %v213 = vpop.f32.mrb[0].mxu0
    %v214 = vadd.f32 0.0, %v213
    %v215 = vpop.f32.mrb[0].mxu0
    %216 = vmatprep.mubr.bf16.mxu0 0
    %217 = vmatmul.mubr.bf16.gmra.mrb[0].mxu0 %v90
    %v218 = vpop.f32.mrb[0].mxu0
    %v219 = vadd.f32 0.0, %v218
    %v220 = vpop.f32.mrb[0].mxu0
    %v221 = vpop.f32.mrb[0].mxu0
    %v222 = vadd.f32 0.0, %v221
    %v223 = vpop.f32.mrb[0].mxu0
    %224 = vmatprep.mubr.bf16.mxu0 0
    %225 = vmatmul.mubr.bf16.gmra.mrb[0].mxu0 %v91
    %v226 = vpop.f32.mrb[0].mxu0
    %v227 = vadd.f32 0.0, %v226
    %v228 = vpop.f32.mrb[0].mxu0
    %v229 = vpop.f32.mrb[0].mxu0
    %v230 = vadd.f32 0.0, %v229
    %v231 = vpop.f32.mrb[0].mxu0
    %232 = vmatprep.mubr.bf16.mxu0 0
    %233 = vmatmul.mubr.bf16.gmra.mrb[0].mxu0 %v92
    %v234 = vpop.f32.mrb[0].mxu0
    %v235 = vadd.f32 0.0, %v234
    %v236 = vpop.f32.mrb[0].mxu0
    %v237 = vpop.f32.mrb[0].mxu0
    %v238 = vadd.f32 0.0, %v237
    %v239 = vpop.f32.mrb[0].mxu0
    %240 = vmatprep.mubr.bf16.mxu0 0
    %241 = vmatmul.mubr.bf16.gmra.mrb[0].mxu0 %v93
    %v242 = vpop.f32.mrb[0].mxu0
    %v243 = vadd.f32 0.0, %v242
    %v244 = vpop.f32.mrb[0].mxu0
    %v245 = vpop.f32.mrb[0].mxu0
    %v246 = vadd.f32 0.0, %v245
    %v247 = vpop.f32.mrb[0].mxu0
    %248 = vmatprep.mubr.bf16.mxu0 0
    %249 = vmatmul.mubr.bf16.gmra.mrb[0].mxu0 %v94
    %v250 = vpop.f32.mrb[0].mxu0
    %v251 = vadd.f32 0.0, %v250
    %v252 = vpop.f32.mrb[0].mxu0
    %v253 = vpop.f32.mrb[0].mxu0
    %v254 = vadd.f32 0.0, %v253
    %v255 = vpop.f32.mrb[0].mxu0
    %256 = vmatprep.mubr.bf16.mxu0 0
    %257 = vmatmul.mubr.bf16.gmra.mrb[0].mxu0 %v95
    %v258 = vpop.f32.mrb[0].mxu0
    %v259 = vadd.f32 0.0, %v258
    %v260 = vpop.f32.mrb[0].mxu0
    %v261 = vpop.f32.mrb[0].mxu0
    %v262 = vadd.f32 0.0, %v261
    %v263 = vpop.f32.mrb[0].mxu0
    %264 = vmatprep.mubr.bf16.mxu0 0
    %265 = vmatmul.mubr.bf16.gmra.mrb[0].mxu0 %v96
    %v266 = vpop.f32.mrb[0].mxu0
    %v267 = vadd.f32 0.0, %v266
    %v268 = vpop.f32.mrb[0].mxu0
    %v269 = vpop.f32.mrb[0].mxu0
    %v270 = vadd.f32 0.0, %v269
    %v271 = vpop.f32.mrb[0].mxu0
    %272 = vmatprep.mubr.bf16.mxu0 0
    %273 = vmatmul.mubr.bf16.gmra.mrb[0].mxu0 %v97
    %v274 = vpop.f32.mrb[0].mxu0
    %v275 = vadd.f32 0.0, %v274
    %v276 = vpop.f32.mrb[0].mxu0
    %v277 = vpop.f32.mrb[0].mxu0
    %v278 = vadd.f32 0.0, %v277
    %v279 = vpop.f32.mrb[0].mxu0
    %280 = vmatprep.mubr.bf16.mxu0 0
    %281 = vmatmul.mubr.bf16.gmra.mrb[0].mxu0 %v98
    %v282 = vpop.f32.mrb[0].mxu0
    %v283 = vadd.f32 0.0, %v282
    %v284 = vpop.f32.mrb[0].mxu0
    %v285 = vpop.f32.mrb[0].mxu0
    %v286 = vadd.f32 0.0, %v285
    %v287 = vpop.f32.mrb[0].mxu0
    %288 = vmatprep.mubr.bf16.mxu0 0
    %289 = vmatmul.mubr.bf16.gmra.mrb[0].mxu0 %v99
    %v290 = vpop.f32.mrb[0].mxu0
    %v291 = vadd.f32 0.0, %v290
    %v292 = vpop.f32.mrb[0].mxu0
    %v293 = vpop.f32.mrb[0].mxu0
    %v294 = vadd.f32 0.0, %v293
    %v295 = vpop.f32.mrb[0].mxu0
    %296 = vmatprep.mubr.bf16.mxu0 0
    %297 = vmatmul.mubr.bf16.gmra.mrb[0].mxu0 %v100
    %v298 = vpop.f32.mrb[0].mxu0
    %v299 = vadd.f32 0.0, %v298
    %v300 = vpop.f32.mrb[0].mxu0
    %v301 = vpop.f32.mrb[0].mxu0
    %v302 = vadd.f32 0.0, %v301
    %v303 = vpop.f32.mrb[0].mxu0
    %304 = vmatprep.mubr.bf16.mxu0 0
    %305 = vmatmul.mubr.bf16.gmra.mrb[0].mxu0 %v101
    %v306 = vpop.f32.mrb[0].mxu0
    %v307 = vadd.f32 0.0, %v306
    %v308 = vpop.f32.mrb[0].mxu0
    %v309 = vpop.f32.mrb[0].mxu0
    %v310 = vadd.f32 0.0, %v309
    %v311 = vpop.f32.mrb[0].mxu0
    %312 = vmatprep.mubr.bf16.mxu0 0
    %313 = vmatmul.mubr.bf16.gmra.mrb[0].mxu0 %v102
    %v314 = vpop.f32.mrb[0].mxu0
    %v315 = vadd.f32 0.0, %v314
    %v316 = vpop.f32.mrb[0].mxu0
    %v317 = vpop.f32.mrb[0].mxu0
    %v318 = vadd.f32 0.0, %v317
    %v319 = vpop.f32.mrb[0].mxu0
    %320 = vmatprep.mubr.bf16.mxu0 0
    %321 = vmatmul.mubr.bf16.gmra.mrb[0].mxu0 %v103
    %v322 = vpop.f32.mrb[0].mxu0
    %v323 = vadd.f32 0.0, %v322
    %v324 = vpop.f32.mrb[0].mxu0
    %v325 = vpop.f32.mrb[0].mxu0
    %v326 = vadd.f32 0.0, %v325
    %v327 = vpop.f32.mrb[0].mxu0
    %328 = vdwg.mxu0
    %v329 = vmul.f32 %v203, %v203
    %v330 = vmul.f32 %v206, %v206
    %v331 = vmul.f32 %v211, %v211
    %v332 = vmul.f32 %v214, %v214
    %v333 = vmul.f32 %v219, %v219
    %v334 = vmul.f32 %v222, %v222
    %v335 = vmul.f32 %v227, %v227
    %v336 = vmul.f32 %v230, %v230
    %v337 = vmul.f32 %v235, %v235
    %v338 = vmul.f32 %v238, %v238
    %v339 = vmul.f32 %v243, %v243
    %v340 = vmul.f32 %v246, %v246
    %v341 = vmul.f32 %v251, %v251
    %v342 = vmul.f32 %v254, %v254
    %v343 = vmul.f32 %v259, %v259
    %v344 = vmul.f32 %v262, %v262
    %v345 = vmul.f32 %v267, %v267
    %v346 = vmul.f32 %v270, %v270
    %v347 = vmul.f32 %v275, %v275
    %v348 = vmul.f32 %v278, %v278
    %v349 = vmul.f32 %v283, %v283
    %v350 = vmul.f32 %v286, %v286
    %v351 = vmul.f32 %v291, %v291
    %v352 = vmul.f32 %v294, %v294
    %v353 = vmul.f32 %v299, %v299
    %v354 = vmul.f32 %v302, %v302
    %v355 = vmul.f32 %v307, %v307
    %v356 = vmul.f32 %v310, %v310
    %v357 = vmul.f32 %v315, %v315
    %v358 = vmul.f32 %v318, %v318
    %v359 = vmul.f32 %v323, %v323
    %v360 = vmul.f32 %v326, %v326
    %361 = vmatprep.subr.mxu0 %v329
    %362 = vmatpush1.msra.mxu0 %v203
    %363 = vmatprep.subr.mxu0 %v330
    %364 = vmatpush1.msra.mxu0 %v206
    %365 = vmatprep.subr.mxu0 %v331
    %366 = vmatpush1.msra.mxu0 %v211
    %367 = vmatprep.subr.mxu0 %v332
    %368 = vmatpush1.msra.mxu0 %v214
    %369 = vmatprep.subr.mxu0 %v333
    %370 = vmatpush1.msra.mxu0 %v219
    %371 = vmatprep.subr.mxu0 %v334
    %372 = vmatpush1.msra.mxu0 %v222
    %373 = vmatprep.subr.mxu0 %v335
    %374 = vmatpush1.msra.mxu0 %v227
    %375 = vmatprep.subr.mxu0 %v336
    %376 = vmatpush1.msra.mxu0 %v230
    %377 = vmatprep.subr.mxu0 %v337
    %378 = vmatpush1.msra.mxu0 %v235
    %379 = vmatprep.subr.mxu0 %v338
    %380 = vmatpush1.msra.mxu0 %v238
    %381 = vmatprep.subr.mxu0 %v339
    %382 = vmatpush1.msra.mxu0 %v243
    %383 = vmatprep.subr.mxu0 %v340
    %384 = vmatpush1.msra.mxu0 %v246
    %385 = vmatprep.subr.mxu0 %v341
    %386 = vmatpush1.msra.mxu0 %v251
    %387 = vmatprep.subr.mxu0 %v342
    %388 = vmatpush1.msra.mxu0 %v254
    %389 = vmatprep.subr.mxu0 %v343
    %390 = vmatpush1.msra.mxu0 %v259
    %391 = vmatprep.subr.mxu0 %v344
    %392 = vmatpush1.msra.mxu0 %v262
    %393 = vmatprep.subr.mxu0 %v345
    %394 = vmatpush1.msra.mxu0 %v267
    %395 = vmatprep.subr.mxu0 %v346
    %396 = vmatpush1.msra.mxu0 %v270
    %397 = vmatprep.subr.mxu0 %v347
    %398 = vmatpush1.msra.mxu0 %v275
    %399 = vmatprep.subr.mxu0 %v348
    %400 = vmatpush1.msra.mxu0 %v278
    %401 = vmatprep.subr.mxu0 %v349
    %402 = vmatpush1.msra.mxu0 %v283
    %403 = vmatprep.subr.mxu0 %v350
    %404 = vmatpush1.msra.mxu0 %v286
    %405 = vmatprep.subr.mxu0 %v351
    %406 = vmatpush1.msra.mxu0 %v291
    %407 = vmatprep.subr.mxu0 %v352
    %408 = vmatpush1.msra.mxu0 %v294
    %409 = vmatprep.subr.mxu0 %v353
    %410 = vmatpush1.msra.mxu0 %v299
    %411 = vmatprep.subr.mxu0 %v354
    %412 = vmatpush1.msra.mxu0 %v302
    %413 = vmatprep.subr.mxu0 %v355
    %414 = vmatpush1.msra.mxu0 %v307
    %415 = vmatprep.subr.mxu0 %v356
    %416 = vmatpush1.msra.mxu0 %v310
    %417 = vmatprep.subr.mxu0 %v357
    %418 = vmatpush1.msra.mxu0 %v315
    %419 = vmatprep.subr.mxu0 %v358
    %420 = vmatpush1.msra.mxu0 %v318
    %421 = vmatprep.subr.mxu0 %v359
    %422 = vmatpush1.msra.mxu0 %v323
    %423 = vmatprep.subr.mxu0 %v360
    %424 = vmatpush1.msra.mxu0 %v326
    %425 = vmatprep.mubr.f32.mxu0 0.00390625
    %426 = vmatmul.mubr.f32.gmra.mrb[0].mxu0 0.00390625
    %v427 = vpop.f32.mrb[0].mxu0
    %v428 = vadd.f32 0.0, %v427
    %v429 = vpop.f32.mrb[0].mxu0
    %v430 = vadd.f32 0.0, %v429
    %431 = vdwg.mxu0
    %v432 = vmul.f32 %v428, %v428
    %v433 = vsub.f32 %v430, %v432
    %v434 = vadd.f32 %v433, 1e-05
    %v435 = vrsqrt.pop %v434
    %v436 = vmul.f32 %v87, %v435
    %v437 = vlaneseq
    %v438 = vshrl.u32 %v437, 7
    %v439 = vsub.s32 0, %v438
    %v440 = vrot.slane %v428, %v439
    %v441 = vsub.f32 %v203, %v440
    %v442 = vsub.f32 %v206, %v440
    %v443 = vsub.f32 %v211, %v440
    %v444 = vsub.f32 %v214, %v440
    %v445 = vsub.f32 %v219, %v440
    %v446 = vsub.f32 %v222, %v440
    %v447 = vsub.f32 %v227, %v440
    %v448 = vsub.f32 %v230, %v440
    %v449 = vsub.f32 %v235, %v440
    %v450 = vsub.f32 %v238, %v440
    %v451 = vsub.f32 %v243, %v440
    %v452 = vsub.f32 %v246, %v440
    %v453 = vsub.f32 %v251, %v440
    %v454 = vsub.f32 %v254, %v440
    %v455 = vsub.f32 %v259, %v440
    %v456 = vsub.f32 %v262, %v440
    %v457 = vsub.f32 %v267, %v440
    %v458 = vsub.f32 %v270, %v440
    %v459 = vsub.f32 %v275, %v440
    %v460 = vsub.f32 %v278, %v440
    %v461 = vsub.f32 %v283, %v440
    %v462 = vsub.f32 %v286, %v440
    %v463 = vsub.f32 %v291, %v440
    %v464 = vsub.f32 %v294, %v440
    %v465 = vsub.f32 %v299, %v440
    %v466 = vsub.f32 %v302, %v440
    %v467 = vsub.f32 %v307, %v440
    %v468 = vsub.f32 %v310, %v440
    %v469 = vsub.f32 %v315, %v440
    %v470 = vsub.f32 %v318, %v440
    %v471 = vsub.f32 %v323, %v440
    %v472 = vsub.f32 %v326, %v440
    %v473 = vlaneseq
    %v474 = vshrl.u32 %v473, 7
    %v475 = vsub.s32 0, %v474
    %v476 = vrot.slane %v436, %v475
    %v477 = vmul.f32 %v441, %v476
    %v478 = vmul.f32 %v442, %v476
    %v479 = vmul.f32 %v443, %v476
    %v480 = vmul.f32 %v444, %v476
    %v481 = vmul.f32 %v445, %v476
    %v482 = vmul.f32 %v446, %v476
    %v483 = vmul.f32 %v447, %v476
    %v484 = vmul.f32 %v448, %v476
    %v485 = vmul.f32 %v449, %v476
    %v486 = vmul.f32 %v450, %v476
    %v487 = vmul.f32 %v451, %v476
    %v488 = vmul.f32 %v452, %v476
    %v489 = vmul.f32 %v453, %v476
    %v490 = vmul.f32 %v454, %v476
    %v491 = vmul.f32 %v455, %v476
    %v492 = vmul.f32 %v456, %v476
    %v493 = vmul.f32 %v457, %v476
    %v494 = vmul.f32 %v458, %v476
    %v495 = vmul.f32 %v459, %v476
    %v496 = vmul.f32 %v460, %v476
    %v497 = vmul.f32 %v461, %v476
    %v498 = vmul.f32 %v462, %v476
    %v499 = vmul.f32 %v463, %v476
    %v500 = vmul.f32 %v464, %v476
    %v501 = vmul.f32 %v465, %v476
    %v502 = vmul.f32 %v466, %v476
    %v503 = vmul.f32 %v467, %v476
    %v504 = vmul.f32 %v468, %v476
    %v505 = vmul.f32 %v469, %v476
    %v506 = vmul.f32 %v470, %v476
    %v507 = vmul.f32 %v471, %v476
    %v508 = vmul.f32 %v472, %v476
    %v509 = vlaneseq
    %v510 = vshrl.u32 %v509, 7
    %v511 = vsub.s32 1, %v510
    %v512 = vrot.slane %v87, %v511
    %v513 = vadd.f32 %v477, %v512
    %v514 = vadd.f32 %v478, %v512
    %v515 = vadd.f32 %v479, %v512
    %v516 = vadd.f32 %v480, %v512
    %v517 = vadd.f32 %v481, %v512
    %v518 = vadd.f32 %v482, %v512
    %v519 = vadd.f32 %v483, %v512
    %v520 = vadd.f32 %v484, %v512
    %v521 = vadd.f32 %v485, %v512
    %v522 = vadd.f32 %v486, %v512
    %v523 = vadd.f32 %v487, %v512
    %v524 = vadd.f32 %v488, %v512
    %v525 = vadd.f32 %v489, %v512
    %v526 = vadd.f32 %v490, %v512
    %v527 = vadd.f32 %v491, %v512
    %v528 = vadd.f32 %v492, %v512
    %v529 = vadd.f32 %v493, %v512
    %v530 = vadd.f32 %v494, %v512
    %v531 = vadd.f32 %v495, %v512
    %v532 = vadd.f32 %v496, %v512
    %v533 = vadd.f32 %v497, %v512
    %v534 = vadd.f32 %v498, %v512
    %v535 = vadd.f32 %v499, %v512
    %v536 = vadd.f32 %v500, %v512
    %v537 = vadd.f32 %v501, %v512
    %v538 = vadd.f32 %v502, %v512
    %v539 = vadd.f32 %v503, %v512
    %v540 = vadd.f32 %v504, %v512
    %v541 = vadd.f32 %v505, %v512
    %v542 = vadd.f32 %v506, %v512
    %v543 = vadd.f32 %v507, %v512
    %v544 = vadd.f32 %v508, %v512
    %vm545 = vcmp.gt.f32.partialorder %v513, 0.0
    %vm546 = vcmp.gt.f32.partialorder %v514, 0.0
    %vm547 = vcmp.gt.f32.partialorder %v515, 0.0
    %vm548 = vcmp.gt.f32.partialorder %v516, 0.0
    %vm549 = vcmp.gt.f32.partialorder %v517, 0.0
    %vm550 = vcmp.gt.f32.partialorder %v518, 0.0
    %vm551 = vcmp.gt.f32.partialorder %v519, 0.0
    %vm552 = vcmp.gt.f32.partialorder %v520, 0.0
    %vm553 = vcmp.gt.f32.partialorder %v521, 0.0
    %vm554 = vcmp.gt.f32.partialorder %v522, 0.0
    %vm555 = vcmp.gt.f32.partialorder %v523, 0.0
    %vm556 = vcmp.gt.f32.partialorder %v524, 0.0
    %vm557 = vcmp.gt.f32.partialorder %v525, 0.0
    %vm558 = vcmp.gt.f32.partialorder %v526, 0.0
    %vm559 = vcmp.gt.f32.partialorder %v527, 0.0
    %vm560 = vcmp.gt.f32.partialorder %v528, 0.0
    %vm561 = vcmp.gt.f32.partialorder %v529, 0.0
    %vm562 = vcmp.gt.f32.partialorder %v530, 0.0
    %vm563 = vcmp.gt.f32.partialorder %v531, 0.0
    %vm564 = vcmp.gt.f32.partialorder %v532, 0.0
    %vm565 = vcmp.gt.f32.partialorder %v533, 0.0
    %vm566 = vcmp.gt.f32.partialorder %v534, 0.0
    %vm567 = vcmp.gt.f32.partialorder %v535, 0.0
    %vm568 = vcmp.gt.f32.partialorder %v536, 0.0
    %vm569 = vcmp.gt.f32.partialorder %v537, 0.0
    %vm570 = vcmp.gt.f32.partialorder %v538, 0.0
    %vm571 = vcmp.gt.f32.partialorder %v539, 0.0
    %vm572 = vcmp.gt.f32.partialorder %v540, 0.0
    %vm573 = vcmp.gt.f32.partialorder %v541, 0.0
    %vm574 = vcmp.gt.f32.partialorder %v542, 0.0
    %vm575 = vcmp.gt.f32.partialorder %v543, 0.0
    %vm576 = vcmp.gt.f32.partialorder %v544, 0.0
    %v577 = vmul.f32 %v513, 0.2
    %v578 = vmul.f32 %v514, 0.2
    %v579 = vmul.f32 %v515, 0.2
    %v580 = vmul.f32 %v516, 0.2
    %v581 = vmul.f32 %v517, 0.2
    %v582 = vmul.f32 %v518, 0.2
    %v583 = vmul.f32 %v519, 0.2
    %v584 = vmul.f32 %v520, 0.2
    %v585 = vmul.f32 %v521, 0.2
    %v586 = vmul.f32 %v522, 0.2
    %v587 = vmul.f32 %v523, 0.2
    %v588 = vmul.f32 %v524, 0.2
    %v589 = vmul.f32 %v525, 0.2
    %v590 = vmul.f32 %v526, 0.2
    %v591 = vmul.f32 %v527, 0.2
    %v592 = vmul.f32 %v528, 0.2
    %v593 = vmul.f32 %v529, 0.2
    %v594 = vmul.f32 %v530, 0.2
    %v595 = vmul.f32 %v531, 0.2
    %v596 = vmul.f32 %v532, 0.2
    %v597 = vmul.f32 %v533, 0.2
    %v598 = vmul.f32 %v534, 0.2
    %v599 = vmul.f32 %v535, 0.2
    %v600 = vmul.f32 %v536, 0.2
    %v601 = vmul.f32 %v537, 0.2
    %v602 = vmul.f32 %v538, 0.2
    %v603 = vmul.f32 %v539, 0.2
    %v604 = vmul.f32 %v540, 0.2
    %v605 = vmul.f32 %v541, 0.2
    %v606 = vmul.f32 %v542, 0.2
    %v607 = vmul.f32 %v543, 0.2
    %v608 = vmul.f32 %v544, 0.2
    %v609 = vsel %vm545, %v513, %v577
    %v610 = vsel %vm546, %v514, %v578
    %v611 = vsel %vm547, %v515, %v579
    %v612 = vsel %vm548, %v516, %v580
    %v613 = vsel %vm549, %v517, %v581
    %v614 = vsel %vm550, %v518, %v582
    %v615 = vsel %vm551, %v519, %v583
    %v616 = vsel %vm552, %v520, %v584
    %v617 = vsel %vm553, %v521, %v585
    %v618 = vsel %vm554, %v522, %v586
    %v619 = vsel %vm555, %v523, %v587
    %v620 = vsel %vm556, %v524, %v588
    %v621 = vsel %vm557, %v525, %v589
    %v622 = vsel %vm558, %v526, %v590
    %v623 = vsel %vm559, %v527, %v591
    %v624 = vsel %vm560, %v528, %v592
    %v625 = vsel %vm561, %v529, %v593
    %v626 = vsel %vm562, %v530, %v594
    %v627 = vsel %vm563, %v531, %v595
    %v628 = vsel %vm564, %v532, %v596
    %v629 = vsel %vm565, %v533, %v597
    %v630 = vsel %vm566, %v534, %v598
    %v631 = vsel %vm567, %v535, %v599
    %v632 = vsel %vm568, %v536, %v600
    %v633 = vsel %vm569, %v537, %v601
    %v634 = vsel %vm570, %v538, %v602
    %v635 = vsel %vm571, %v539, %v603
    %v636 = vsel %vm572, %v540, %v604
    %v637 = vsel %vm573, %v541, %v605
    %v638 = vsel %vm574, %v542, %v606
    %v639 = vsel %vm575, %v543, %v607
    %v640 = vsel %vm576, %v544, %v608
    %v641 = vpack.c.bf16 %v610, %v609
    %v642 = vpack.c.bf16 %v612, %v611
    %v643 = vpack.c.bf16 %v614, %v613
    %v644 = vpack.c.bf16 %v616, %v615
    %v645 = vpack.c.bf16 %v618, %v617
    %v646 = vpack.c.bf16 %v620, %v619
    %v647 = vpack.c.bf16 %v622, %v621
    %v648 = vpack.c.bf16 %v624, %v623
    %v649 = vpack.c.bf16 %v626, %v625
    %v650 = vpack.c.bf16 %v628, %v627
    %v651 = vpack.c.bf16 %v630, %v629
    %v652 = vpack.c.bf16 %v632, %v631
    %v653 = vpack.c.bf16 %v634, %v633
    %v654 = vpack.c.bf16 %v636, %v635
    %v655 = vpack.c.bf16 %v638, %v637
    %v656 = vpack.c.bf16 %v640, %v639
    %s657 = scalar_lea.vmem [#allocation5], 64
    %v658 = vld [vmem:[%s657] sm:$0xf]
    %v659 = vld [vmem:[%s657 + $0x4] sm:$0xf]
    %v660 = vld [vmem:[%s657 + $0x8] sm:$0xf]
    %v661 = vld [vmem:[%s657 + $0xc] sm:$0xf]
    %v662 = vld [vmem:[%s657 + $0x10] sm:$0xf]
    %v663 = vld [vmem:[%s657 + $0x14] sm:$0xf]
    %v664 = vld [vmem:[%s657 + $0x18] sm:$0xf]
    %v665 = vld [vmem:[%s657 + $0x1c] sm:$0xf]
    %v666 = vld [vmem:[%s657 + $0x20] sm:$0xf]
    %v667 = vld [vmem:[%s657 + $0x24] sm:$0xf]
    %v668 = vld [vmem:[%s657 + $0x28] sm:$0xf]
    %v669 = vld [vmem:[%s657 + $0x2c] sm:$0xf]
    %v670 = vld [vmem:[%s657 + $0x30] sm:$0xf]
    %v671 = vld [vmem:[%s657 + $0x34] sm:$0xf]
    %v672 = vld [vmem:[%s657 + $0x38] sm:$0xf]
    %v673 = vld [vmem:[%s657 + $0x3c] sm:$0xf]
    %v690 = vunpack.c.l.b16 %v658
    %v691 = vunpack.c.l.b16 %v659
    %v692 = vunpack.c.l.b16 %v660
    %v693 = vunpack.c.l.b16 %v661
    %v694 = vunpack.c.l.b16 %v662
    %v695 = vunpack.c.l.b16 %v663
    %v696 = vunpack.c.l.b16 %v664
    %v697 = vunpack.c.l.b16 %v665
    %v698 = vunpack.c.l.b16 %v666
    %v699 = vunpack.c.l.b16 %v667
    %v700 = vunpack.c.l.b16 %v668
    %v701 = vunpack.c.l.b16 %v669
    %v702 = vunpack.c.l.b16 %v670
    %v703 = vunpack.c.l.b16 %v671
    %v704 = vunpack.c.l.b16 %v672
    %v705 = vunpack.c.l.b16 %v673
    %v706 = vpack.c.b16 %v691, %v690
    %v707 = vpack.c.b16 %v693, %v692
    %v708 = vpack.c.b16 %v695, %v694
    %v709 = vpack.c.b16 %v697, %v696
    %v710 = vpack.c.b16 %v699, %v698
    %v711 = vpack.c.b16 %v701, %v700
    %v712 = vpack.c.b16 %v703, %v702
    %v713 = vpack.c.b16 %v705, %v704
    %722 = vmatprep.subr.bf16.mxu0 0
    %723 = vmatpush1.bf16.msra.mxu0 %v706
    %724 = vmatprep.subr.bf16.mxu0 0
    %725 = vmatpush1.bf16.msra.mxu0 %v707
    %726 = vmatprep.subr.bf16.mxu0 0
    %727 = vmatpush1.bf16.msra.mxu0 %v708
    %728 = vmatprep.subr.bf16.mxu0 0
    %729 = vmatpush1.bf16.msra.mxu0 %v709
    %730 = vmatprep.subr.bf16.mxu0 0
    %731 = vmatpush1.bf16.msra.mxu0 %v710
    %732 = vmatprep.subr.bf16.mxu0 0
    %733 = vmatpush1.bf16.msra.mxu0 %v711
    %734 = vmatprep.subr.bf16.mxu0 0
    %735 = vmatpush1.bf16.msra.mxu0 %v712
    %736 = vmatprep.subr.bf16.mxu0 0
    %737 = vmatpush1.bf16.msra.mxu0 %v713
    %738 = vmatprep.subr.bf16.mxu0 0
    %739 = vmatpush1.bf16.msra.mxu0 0
    %740 = vmatprep.subr.bf16.mxu0 0
    %741 = vmatpush1.bf16.msra.mxu0 0
    %742 = vmatprep.subr.bf16.mxu0 0
    %743 = vmatpush1.bf16.msra.mxu0 0
    %744 = vmatprep.subr.bf16.mxu0 0
    %745 = vmatpush1.bf16.msra.mxu0 0
    %746 = vmatprep.subr.bf16.mxu0 0
    %747 = vmatpush1.bf16.msra.mxu0 0
    %748 = vmatprep.subr.bf16.mxu0 0
    %749 = vmatpush1.bf16.msra.mxu0 0
    %750 = vmatprep.subr.bf16.mxu0 0
    %751 = vmatpush1.bf16.msra.mxu0 0
    %752 = vmatprep.subr.bf16.mxu0 0
    %753 = vmatpush1.bf16.msra.mxu0 0
    %754 = vmatprep.mubr.bf16.mxu0 0
    %755 = vmatmul.mubr.bf16.gmra.mrb[0].mxu0 %v641
    %v756 = vpop.f32.mrb[0].mxu0
    %v757 = vadd.f32 0.0, %v756
    %v758 = vpop.f32.mrb[0].mxu0
    %v759 = vpop.f32.mrb[0].mxu0
    %v760 = vadd.f32 0.0, %v759
    %v761 = vpop.f32.mrb[0].mxu0
    %762 = vmatprep.mubr.bf16.mxu0 0
    %763 = vmatmul.mubr.bf16.gmra.mrb[0].mxu0 %v642
    %v764 = vpop.f32.mrb[0].mxu0
    %v765 = vadd.f32 0.0, %v764
    %v766 = vpop.f32.mrb[0].mxu0
    %v767 = vpop.f32.mrb[0].mxu0
    %v768 = vadd.f32 0.0, %v767
    %v769 = vpop.f32.mrb[0].mxu0
    %770 = vmatprep.mubr.bf16.mxu0 0
    %771 = vmatmul.mubr.bf16.gmra.mrb[0].mxu0 %v643
    %v772 = vpop.f32.mrb[0].mxu0
    %v773 = vadd.f32 0.0, %v772
    %v774 = vpop.f32.mrb[0].mxu0
    %v775 = vpop.f32.mrb[0].mxu0
    %v776 = vadd.f32 0.0, %v775
    %v777 = vpop.f32.mrb[0].mxu0
    %778 = vmatprep.mubr.bf16.mxu0 0
    %779 = vmatmul.mubr.bf16.gmra.mrb[0].mxu0 %v644
    %v780 = vpop.f32.mrb[0].mxu0
    %v781 = vadd.f32 0.0, %v780
    %v782 = vpop.f32.mrb[0].mxu0
    %v783 = vpop.f32.mrb[0].mxu0
    %v784 = vadd.f32 0.0, %v783
    %v785 = vpop.f32.mrb[0].mxu0
    %786 = vmatprep.mubr.bf16.mxu0 0
    %787 = vmatmul.mubr.bf16.gmra.mrb[0].mxu0 %v645
    %v788 = vpop.f32.mrb[0].mxu0
    %v789 = vadd.f32 0.0, %v788
    %v790 = vpop.f32.mrb[0].mxu0
    %v791 = vpop.f32.mrb[0].mxu0
    %v792 = vadd.f32 0.0, %v791
    %v793 = vpop.f32.mrb[0].mxu0
    %794 = vmatprep.mubr.bf16.mxu0 0
    %795 = vmatmul.mubr.bf16.gmra.mrb[0].mxu0 %v646
    %v796 = vpop.f32.mrb[0].mxu0
    %v797 = vadd.f32 0.0, %v796
    %v798 = vpop.f32.mrb[0].mxu0
    %v799 = vpop.f32.mrb[0].mxu0
    %v800 = vadd.f32 0.0, %v799
    %v801 = vpop.f32.mrb[0].mxu0
    %802 = vmatprep.mubr.bf16.mxu0 0
    %803 = vmatmul.mubr.bf16.gmra.mrb[0].mxu0 %v647
    %v804 = vpop.f32.mrb[0].mxu0
    %v805 = vadd.f32 0.0, %v804
    %v806 = vpop.f32.mrb[0].mxu0
    %v807 = vpop.f32.mrb[0].mxu0
    %v808 = vadd.f32 0.0, %v807
    %v809 = vpop.f32.mrb[0].mxu0
    %810 = vmatprep.mubr.bf16.mxu0 0
    %811 = vmatmul.mubr.bf16.gmra.mrb[0].mxu0 %v648
    %v812 = vpop.f32.mrb[0].mxu0
    %v813 = vadd.f32 0.0, %v812
    %v814 = vpop.f32.mrb[0].mxu0
    %v815 = vpop.f32.mrb[0].mxu0
    %v816 = vadd.f32 0.0, %v815
    %v817 = vpop.f32.mrb[0].mxu0
    %818 = vmatprep.mubr.bf16.mxu0 0
    %819 = vmatmul.mubr.bf16.gmra.mrb[0].mxu0 %v649
    %v820 = vpop.f32.mrb[0].mxu0
    %v821 = vadd.f32 0.0, %v820
    %v822 = vpop.f32.mrb[0].mxu0
    %v823 = vpop.f32.mrb[0].mxu0
    %v824 = vadd.f32 0.0, %v823
    %v825 = vpop.f32.mrb[0].mxu0
    %826 = vmatprep.mubr.bf16.mxu0 0
    %827 = vmatmul.mubr.bf16.gmra.mrb[0].mxu0 %v650
    %v828 = vpop.f32.mrb[0].mxu0
    %v829 = vadd.f32 0.0, %v828
    %v830 = vpop.f32.mrb[0].mxu0
    %v831 = vpop.f32.mrb[0].mxu0
    %v832 = vadd.f32 0.0, %v831
    %v833 = vpop.f32.mrb[0].mxu0
    %834 = vmatprep.mubr.bf16.mxu0 0
    %835 = vmatmul.mubr.bf16.gmra.mrb[0].mxu0 %v651
    %v836 = vpop.f32.mrb[0].mxu0
    %v837 = vadd.f32 0.0, %v836
    %v838 = vpop.f32.mrb[0].mxu0
    %v839 = vpop.f32.mrb[0].mxu0
    %v840 = vadd.f32 0.0, %v839
    %v841 = vpop.f32.mrb[0].mxu0
    %842 = vmatprep.mubr.bf16.mxu0 0
    %843 = vmatmul.mubr.bf16.gmra.mrb[0].mxu0 %v652
    %v844 = vpop.f32.mrb[0].mxu0
    %v845 = vadd.f32 0.0, %v844
    %v846 = vpop.f32.mrb[0].mxu0
    %v847 = vpop.f32.mrb[0].mxu0
    %v848 = vadd.f32 0.0, %v847
    %v849 = vpop.f32.mrb[0].mxu0
    %850 = vmatprep.mubr.bf16.mxu0 0
    %851 = vmatmul.mubr.bf16.gmra.mrb[0].mxu0 %v653
    %v852 = vpop.f32.mrb[0].mxu0
    %v853 = vadd.f32 0.0, %v852
    %v854 = vpop.f32.mrb[0].mxu0
    %v855 = vpop.f32.mrb[0].mxu0
    %v856 = vadd.f32 0.0, %v855
    %v857 = vpop.f32.mrb[0].mxu0
    %858 = vmatprep.mubr.bf16.mxu0 0
    %859 = vmatmul.mubr.bf16.gmra.mrb[0].mxu0 %v654
    %v860 = vpop.f32.mrb[0].mxu0
    %v861 = vadd.f32 0.0, %v860
    %v862 = vpop.f32.mrb[0].mxu0
    %v863 = vpop.f32.mrb[0].mxu0
    %v864 = vadd.f32 0.0, %v863
    %v865 = vpop.f32.mrb[0].mxu0
    %866 = vmatprep.mubr.bf16.mxu0 0
    %867 = vmatmul.mubr.bf16.gmra.mrb[0].mxu0 %v655
    %v868 = vpop.f32.mrb[0].mxu0
    %v869 = vadd.f32 0.0, %v868
    %v870 = vpop.f32.mrb[0].mxu0
    %v871 = vpop.f32.mrb[0].mxu0
    %v872 = vadd.f32 0.0, %v871
    %v873 = vpop.f32.mrb[0].mxu0
    %874 = vmatprep.mubr.bf16.mxu0 0
    %875 = vmatmul.mubr.bf16.gmra.mrb[0].mxu0 %v656
    %v876 = vpop.f32.mrb[0].mxu0
    %v877 = vadd.f32 0.0, %v876
    %v878 = vpop.f32.mrb[0].mxu0
    %v879 = vpop.f32.mrb[0].mxu0
    %v880 = vadd.f32 0.0, %v879
    %v881 = vpop.f32.mrb[0].mxu0
    %882 = vdwg.mxu0
    %v883 = vmul.f32 %v757, %v757
    %v884 = vmul.f32 %v760, %v760
    %v885 = vmul.f32 %v765, %v765
    %v886 = vmul.f32 %v768, %v768
    %v887 = vmul.f32 %v773, %v773
    %v888 = vmul.f32 %v776, %v776
    %v889 = vmul.f32 %v781, %v781
    %v890 = vmul.f32 %v784, %v784
    %v891 = vmul.f32 %v789, %v789
    %v892 = vmul.f32 %v792, %v792
    %v893 = vmul.f32 %v797, %v797
    %v894 = vmul.f32 %v800, %v800
    %v895 = vmul.f32 %v805, %v805
    %v896 = vmul.f32 %v808, %v808
    %v897 = vmul.f32 %v813, %v813
    %v898 = vmul.f32 %v816, %v816
    %v899 = vmul.f32 %v821, %v821
    %v900 = vmul.f32 %v824, %v824
    %v901 = vmul.f32 %v829, %v829
    %v902 = vmul.f32 %v832, %v832
    %v903 = vmul.f32 %v837, %v837
    %v904 = vmul.f32 %v840, %v840
    %v905 = vmul.f32 %v845, %v845
    %v906 = vmul.f32 %v848, %v848
    %v907 = vmul.f32 %v853, %v853
    %v908 = vmul.f32 %v856, %v856
    %v909 = vmul.f32 %v861, %v861
    %v910 = vmul.f32 %v864, %v864
    %v911 = vmul.f32 %v869, %v869
    %v912 = vmul.f32 %v872, %v872
    %v913 = vmul.f32 %v877, %v877
    %v914 = vmul.f32 %v880, %v880
    %915 = vmatprep.subr.mxu0 %v883
    %916 = vmatpush1.msra.mxu0 %v757
    %917 = vmatprep.subr.mxu0 %v884
    %918 = vmatpush1.msra.mxu0 %v760
    %919 = vmatprep.subr.mxu0 %v885
    %920 = vmatpush1.msra.mxu0 %v765
    %921 = vmatprep.subr.mxu0 %v886
    %922 = vmatpush1.msra.mxu0 %v768
    %923 = vmatprep.subr.mxu0 %v887
    %924 = vmatpush1.msra.mxu0 %v773
    %925 = vmatprep.subr.mxu0 %v888
    %926 = vmatpush1.msra.mxu0 %v776
    %927 = vmatprep.subr.mxu0 %v889
    %928 = vmatpush1.msra.mxu0 %v781
    %929 = vmatprep.subr.mxu0 %v890
    %930 = vmatpush1.msra.mxu0 %v784
    %931 = vmatprep.subr.mxu0 %v891
    %932 = vmatpush1.msra.mxu0 %v789
    %933 = vmatprep.subr.mxu0 %v892
    %934 = vmatpush1.msra.mxu0 %v792
    %935 = vmatprep.subr.mxu0 %v893
    %936 = vmatpush1.msra.mxu0 %v797
    %937 = vmatprep.subr.mxu0 %v894
    %938 = vmatpush1.msra.mxu0 %v800
    %939 = vmatprep.subr.mxu0 %v895
    %940 = vmatpush1.msra.mxu0 %v805
    %941 = vmatprep.subr.mxu0 %v896
    %942 = vmatpush1.msra.mxu0 %v808
    %943 = vmatprep.subr.mxu0 %v897
    %944 = vmatpush1.msra.mxu0 %v813
    %945 = vmatprep.subr.mxu0 %v898
    %946 = vmatpush1.msra.mxu0 %v816
    %947 = vmatprep.subr.mxu0 %v899
    %948 = vmatpush1.msra.mxu0 %v821
    %949 = vmatprep.subr.mxu0 %v900
    %950 = vmatpush1.msra.mxu0 %v824
    %951 = vmatprep.subr.mxu0 %v901
    %952 = vmatpush1.msra.mxu0 %v829
    %953 = vmatprep.subr.mxu0 %v902
    %954 = vmatpush1.msra.mxu0 %v832
    %955 = vmatprep.subr.mxu0 %v903
    %956 = vmatpush1.msra.mxu0 %v837
    %957 = vmatprep.subr.mxu0 %v904
    %958 = vmatpush1.msra.mxu0 %v840
    %959 = vmatprep.subr.mxu0 %v905
    %960 = vmatpush1.msra.mxu0 %v845
    %961 = vmatprep.subr.mxu0 %v906
    %962 = vmatpush1.msra.mxu0 %v848
    %963 = vmatprep.subr.mxu0 %v907
    %964 = vmatpush1.msra.mxu0 %v853
    %965 = vmatprep.subr.mxu0 %v908
    %966 = vmatpush1.msra.mxu0 %v856
    %967 = vmatprep.subr.mxu0 %v909
    %968 = vmatpush1.msra.mxu0 %v861
    %969 = vmatprep.subr.mxu0 %v910
    %970 = vmatpush1.msra.mxu0 %v864
    %971 = vmatprep.subr.mxu0 %v911
    %972 = vmatpush1.msra.mxu0 %v869
    %973 = vmatprep.subr.mxu0 %v912
    %974 = vmatpush1.msra.mxu0 %v872
    %975 = vmatprep.subr.mxu0 %v913
    %976 = vmatpush1.msra.mxu0 %v877
    %977 = vmatprep.subr.mxu0 %v914
    %978 = vmatpush1.msra.mxu0 %v880
    %979 = vmatprep.mubr.f32.mxu0 0.00390625
    %980 = vmatmul.mubr.f32.gmra.mrb[0].mxu0 0.00390625
    %v981 = vpop.f32.mrb[0].mxu0
    %v982 = vadd.f32 0.0, %v981
    %v983 = vpop.f32.mrb[0].mxu0
    %v984 = vadd.f32 0.0, %v983
    %985 = vdwg.mxu0
    %v986 = vmul.f32 %v982, %v982
    %v987 = vsub.f32 %v984, %v986
    %v988 = vadd.f32 %v987, 1e-05
    %v989 = vrsqrt.pop %v988
    %v991 = vrot.slane %v989, 6
    %v993 = vmul.f32 %v87, %v991
    %v994 = vlaneseq
    %v995 = vshrl.u32 %v994, 7
    %v996 = vsub.s32 0, %v995
    %v997 = vrot.slane %v982, %v996
    %v998 = vsub.f32 %v757, %v997
    %v999 = vsub.f32 %v760, %v997
    %v1000 = vsub.f32 %v765, %v997
    %v1001 = vsub.f32 %v768, %v997
    %v1002 = vsub.f32 %v773, %v997
    %v1003 = vsub.f32 %v776, %v997
    %v1004 = vsub.f32 %v781, %v997
    %v1005 = vsub.f32 %v784, %v997
    %v1006 = vsub.f32 %v789, %v997
    %v1007 = vsub.f32 %v792, %v997
    %v1008 = vsub.f32 %v797, %v997
    %v1009 = vsub.f32 %v800, %v997
    %v1010 = vsub.f32 %v805, %v997
    %v1011 = vsub.f32 %v808, %v997
    %v1012 = vsub.f32 %v813, %v997
    %v1013 = vsub.f32 %v816, %v997
    %v1014 = vsub.f32 %v821, %v997
    %v1015 = vsub.f32 %v824, %v997
    %v1016 = vsub.f32 %v829, %v997
    %v1017 = vsub.f32 %v832, %v997
    %v1018 = vsub.f32 %v837, %v997
    %v1019 = vsub.f32 %v840, %v997
    %v1020 = vsub.f32 %v845, %v997
    %v1021 = vsub.f32 %v848, %v997
    %v1022 = vsub.f32 %v853, %v997
    %v1023 = vsub.f32 %v856, %v997
    %v1024 = vsub.f32 %v861, %v997
    %v1025 = vsub.f32 %v864, %v997
    %v1026 = vsub.f32 %v869, %v997
    %v1027 = vsub.f32 %v872, %v997
    %v1028 = vsub.f32 %v877, %v997
    %v1029 = vsub.f32 %v880, %v997
    %v1030 = vlaneseq
    %v1031 = vshrl.u32 %v1030, 7
    %v1032 = vsub.s32 2, %v1031
    %v1033 = vrot.slane %v993, %v1032
    %v1034 = vmul.f32 %v998, %v1033
    %v1035 = vmul.f32 %v999, %v1033
    %v1036 = vmul.f32 %v1000, %v1033
    %v1037 = vmul.f32 %v1001, %v1033
    %v1038 = vmul.f32 %v1002, %v1033
    %v1039 = vmul.f32 %v1003, %v1033
    %v1040 = vmul.f32 %v1004, %v1033
    %v1041 = vmul.f32 %v1005, %v1033
    %v1042 = vmul.f32 %v1006, %v1033
    %v1043 = vmul.f32 %v1007, %v1033
    %v1044 = vmul.f32 %v1008, %v1033
    %v1045 = vmul.f32 %v1009, %v1033
    %v1046 = vmul.f32 %v1010, %v1033
    %v1047 = vmul.f32 %v1011, %v1033
    %v1048 = vmul.f32 %v1012, %v1033
    %v1049 = vmul.f32 %v1013, %v1033
    %v1050 = vmul.f32 %v1014, %v1033
    %v1051 = vmul.f32 %v1015, %v1033
    %v1052 = vmul.f32 %v1016, %v1033
    %v1053 = vmul.f32 %v1017, %v1033
    %v1054 = vmul.f32 %v1018, %v1033
    %v1055 = vmul.f32 %v1019, %v1033
    %v1056 = vmul.f32 %v1020, %v1033
    %v1057 = vmul.f32 %v1021, %v1033
    %v1058 = vmul.f32 %v1022, %v1033
    %v1059 = vmul.f32 %v1023, %v1033
    %v1060 = vmul.f32 %v1024, %v1033
    %v1061 = vmul.f32 %v1025, %v1033
    %v1062 = vmul.f32 %v1026, %v1033
    %v1063 = vmul.f32 %v1027, %v1033
    %v1064 = vmul.f32 %v1028, %v1033
    %v1065 = vmul.f32 %v1029, %v1033
    %v1066 = vlaneseq
    %v1067 = vshrl.u32 %v1066, 7
    %v1068 = vsub.s32 3, %v1067
    %v1069 = vrot.slane %v87, %v1068
    %v1070 = vadd.f32 %v1034, %v1069
    %v1071 = vadd.f32 %v1035, %v1069
    %v1072 = vadd.f32 %v1036, %v1069
    %v1073 = vadd.f32 %v1037, %v1069
    %v1074 = vadd.f32 %v1038, %v1069
    %v1075 = vadd.f32 %v1039, %v1069
    %v1076 = vadd.f32 %v1040, %v1069
    %v1077 = vadd.f32 %v1041, %v1069
    %v1078 = vadd.f32 %v1042, %v1069
    %v1079 = vadd.f32 %v1043, %v1069
    %v1080 = vadd.f32 %v1044, %v1069
    %v1081 = vadd.f32 %v1045, %v1069
    %v1082 = vadd.f32 %v1046, %v1069
    %v1083 = vadd.f32 %v1047, %v1069
    %v1084 = vadd.f32 %v1048, %v1069
    %v1085 = vadd.f32 %v1049, %v1069
    %v1086 = vadd.f32 %v1050, %v1069
    %v1087 = vadd.f32 %v1051, %v1069
    %v1088 = vadd.f32 %v1052, %v1069
    %v1089 = vadd.f32 %v1053, %v1069
    %v1090 = vadd.f32 %v1054, %v1069
    %v1091 = vadd.f32 %v1055, %v1069
    %v1092 = vadd.f32 %v1056, %v1069
    %v1093 = vadd.f32 %v1057, %v1069
    %v1094 = vadd.f32 %v1058, %v1069
    %v1095 = vadd.f32 %v1059, %v1069
    %v1096 = vadd.f32 %v1060, %v1069
    %v1097 = vadd.f32 %v1061, %v1069
    %v1098 = vadd.f32 %v1062, %v1069
    %v1099 = vadd.f32 %v1063, %v1069
    %v1100 = vadd.f32 %v1064, %v1069
    %v1101 = vadd.f32 %v1065, %v1069
    %vm1102 = vcmp.gt.f32.partialorder %v1070, 0.0
    %vm1103 = vcmp.gt.f32.partialorder %v1071, 0.0
    %vm1104 = vcmp.gt.f32.partialorder %v1072, 0.0
    %vm1105 = vcmp.gt.f32.partialorder %v1073, 0.0
    %vm1106 = vcmp.gt.f32.partialorder %v1074, 0.0
    %vm1107 = vcmp.gt.f32.partialorder %v1075, 0.0
    %vm1108 = vcmp.gt.f32.partialorder %v1076, 0.0
    %vm1109 = vcmp.gt.f32.partialorder %v1077, 0.0
    %vm1110 = vcmp.gt.f32.partialorder %v1078, 0.0
    %vm1111 = vcmp.gt.f32.partialorder %v1079, 0.0
    %vm1112 = vcmp.gt.f32.partialorder %v1080, 0.0
    %vm1113 = vcmp.gt.f32.partialorder %v1081, 0.0
    %vm1114 = vcmp.gt.f32.partialorder %v1082, 0.0
    %vm1115 = vcmp.gt.f32.partialorder %v1083, 0.0
    %vm1116 = vcmp.gt.f32.partialorder %v1084, 0.0
    %vm1117 = vcmp.gt.f32.partialorder %v1085, 0.0
    %vm1118 = vcmp.gt.f32.partialorder %v1086, 0.0
    %vm1119 = vcmp.gt.f32.partialorder %v1087, 0.0
    %vm1120 = vcmp.gt.f32.partialorder %v1088, 0.0
    %vm1121 = vcmp.gt.f32.partialorder %v1089, 0.0
    %vm1122 = vcmp.gt.f32.partialorder %v1090, 0.0
    %vm1123 = vcmp.gt.f32.partialorder %v1091, 0.0
    %vm1124 = vcmp.gt.f32.partialorder %v1092, 0.0
    %vm1125 = vcmp.gt.f32.partialorder %v1093, 0.0
    %vm1126 = vcmp.gt.f32.partialorder %v1094, 0.0
    %vm1127 = vcmp.gt.f32.partialorder %v1095, 0.0
    %vm1128 = vcmp.gt.f32.partialorder %v1096, 0.0
    %vm1129 = vcmp.gt.f32.partialorder %v1097, 0.0
    %vm1130 = vcmp.gt.f32.partialorder %v1098, 0.0
    %vm1131 = vcmp.gt.f32.partialorder %v1099, 0.0
    %vm1132 = vcmp.gt.f32.partialorder %v1100, 0.0
    %vm1133 = vcmp.gt.f32.partialorder %v1101, 0.0
    %v1134 = vmul.f32 %v1070, 0.2
    %v1135 = vmul.f32 %v1071, 0.2
    %v1136 = vmul.f32 %v1072, 0.2
    %v1137 = vmul.f32 %v1073, 0.2
    %v1138 = vmul.f32 %v1074, 0.2
    %v1139 = vmul.f32 %v1075, 0.2
    %v1140 = vmul.f32 %v1076, 0.2
    %v1141 = vmul.f32 %v1077, 0.2
    %v1142 = vmul.f32 %v1078, 0.2
    %v1143 = vmul.f32 %v1079, 0.2
    %v1144 = vmul.f32 %v1080, 0.2
    %v1145 = vmul.f32 %v1081, 0.2
    %v1146 = vmul.f32 %v1082, 0.2
    %v1147 = vmul.f32 %v1083, 0.2
    %v1148 = vmul.f32 %v1084, 0.2
    %v1149 = vmul.f32 %v1085, 0.2
    %v1150 = vmul.f32 %v1086, 0.2
    %v1151 = vmul.f32 %v1087, 0.2
    %v1152 = vmul.f32 %v1088, 0.2
    %v1153 = vmul.f32 %v1089, 0.2
    %v1154 = vmul.f32 %v1090, 0.2
    %v1155 = vmul.f32 %v1091, 0.2
    %v1156 = vmul.f32 %v1092, 0.2
    %v1157 = vmul.f32 %v1093, 0.2
    %v1158 = vmul.f32 %v1094, 0.2
    %v1159 = vmul.f32 %v1095, 0.2
    %v1160 = vmul.f32 %v1096, 0.2
    %v1161 = vmul.f32 %v1097, 0.2
    %v1162 = vmul.f32 %v1098, 0.2
    %v1163 = vmul.f32 %v1099, 0.2
    %v1164 = vmul.f32 %v1100, 0.2
    %v1165 = vmul.f32 %v1101, 0.2
    %v1166 = vsel %vm1102, %v1070, %v1134
    %v1167 = vsel %vm1103, %v1071, %v1135
    %v1168 = vsel %vm1104, %v1072, %v1136
    %v1169 = vsel %vm1105, %v1073, %v1137
    %v1170 = vsel %vm1106, %v1074, %v1138
    %v1171 = vsel %vm1107, %v1075, %v1139
    %v1172 = vsel %vm1108, %v1076, %v1140
    %v1173 = vsel %vm1109, %v1077, %v1141
    %v1174 = vsel %vm1110, %v1078, %v1142
    %v1175 = vsel %vm1111, %v1079, %v1143
    %v1176 = vsel %vm1112, %v1080, %v1144
    %v1177 = vsel %vm1113, %v1081, %v1145
    %v1178 = vsel %vm1114, %v1082, %v1146
    %v1179 = vsel %vm1115, %v1083, %v1147
    %v1180 = vsel %vm1116, %v1084, %v1148
    %v1181 = vsel %vm1117, %v1085, %v1149
    %v1182 = vsel %vm1118, %v1086, %v1150
    %v1183 = vsel %vm1119, %v1087, %v1151
    %v1184 = vsel %vm1120, %v1088, %v1152
    %v1185 = vsel %vm1121, %v1089, %v1153
    %v1186 = vsel %vm1122, %v1090, %v1154
    %v1187 = vsel %vm1123, %v1091, %v1155
    %v1188 = vsel %vm1124, %v1092, %v1156
    %v1189 = vsel %vm1125, %v1093, %v1157
    %v1190 = vsel %vm1126, %v1094, %v1158
    %v1191 = vsel %vm1127, %v1095, %v1159
    %v1192 = vsel %vm1128, %v1096, %v1160
    %v1193 = vsel %vm1129, %v1097, %v1161
    %v1194 = vsel %vm1130, %v1098, %v1162
    %v1195 = vsel %vm1131, %v1099, %v1163
    %v1196 = vsel %vm1132, %v1100, %v1164
    %v1197 = vsel %vm1133, %v1101, %v1165
    %v1198 = vpack.c.bf16 %v1167, %v1166
    %v1199 = vpack.c.bf16 %v1169, %v1168
    %v1200 = vpack.c.bf16 %v1171, %v1170
    %v1201 = vpack.c.bf16 %v1173, %v1172
    %v1202 = vpack.c.bf16 %v1175, %v1174
    %v1203 = vpack.c.bf16 %v1177, %v1176
    %v1204 = vpack.c.bf16 %v1179, %v1178
    %v1205 = vpack.c.bf16 %v1181, %v1180
    %v1206 = vpack.c.bf16 %v1183, %v1182
    %v1207 = vpack.c.bf16 %v1185, %v1184
    %v1208 = vpack.c.bf16 %v1187, %v1186
    %v1209 = vpack.c.bf16 %v1189, %v1188
    %v1210 = vpack.c.bf16 %v1191, %v1190
    %v1211 = vpack.c.bf16 %v1193, %v1192
    %v1212 = vpack.c.bf16 %v1195, %v1194
    %v1213 = vpack.c.bf16 %v1197, %v1196
    %s1214 = scalar_lea.vmem [#allocation5], 128
    %v1215 = vld [vmem:[%s1214] sm:$0xf]
    %v1216 = vld [vmem:[%s1214 + $0x4] sm:$0xf]
    %v1217 = vld [vmem:[%s1214 + $0x8] sm:$0xf]
    %v1218 = vld [vmem:[%s1214 + $0xc] sm:$0xf]
    %v1219 = vld [vmem:[%s1214 + $0x10] sm:$0xf]
    %v1220 = vld [vmem:[%s1214 + $0x14] sm:$0xf]
    %v1221 = vld [vmem:[%s1214 + $0x18] sm:$0xf]
    %v1222 = vld [vmem:[%s1214 + $0x1c] sm:$0xf]
    %v1223 = vld [vmem:[%s1214 + $0x20] sm:$0xf]
    %v1224 = vld [vmem:[%s1214 + $0x24] sm:$0xf]
    %v1225 = vld [vmem:[%s1214 + $0x28] sm:$0xf]
    %v1226 = vld [vmem:[%s1214 + $0x2c] sm:$0xf]
    %v1227 = vld [vmem:[%s1214 + $0x30] sm:$0xf]
    %v1228 = vld [vmem:[%s1214 + $0x34] sm:$0xf]
    %v1229 = vld [vmem:[%s1214 + $0x38] sm:$0xf]
    %v1230 = vld [vmem:[%s1214 + $0x3c] sm:$0xf]
    %v1247 = vunpack.c.l.b16 %v1215
    %v1248 = vunpack.c.l.b16 %v1216
    %v1249 = vunpack.c.l.b16 %v1217
    %v1250 = vunpack.c.l.b16 %v1218
    %v1251 = vunpack.c.l.b16 %v1219
    %v1252 = vunpack.c.l.b16 %v1220
    %v1253 = vunpack.c.l.b16 %v1221
    %v1254 = vunpack.c.l.b16 %v1222
    %v1255 = vunpack.c.l.b16 %v1223
    %v1256 = vunpack.c.l.b16 %v1224
    %v1257 = vunpack.c.l.b16 %v1225
    %v1258 = vunpack.c.l.b16 %v1226
    %v1259 = vunpack.c.l.b16 %v1227
    %v1260 = vunpack.c.l.b16 %v1228
    %v1261 = vunpack.c.l.b16 %v1229
    %v1262 = vunpack.c.l.b16 %v1230
    %v1263 = vpack.c.b16 %v1248, %v1247
    %v1264 = vpack.c.b16 %v1250, %v1249
    %v1265 = vpack.c.b16 %v1252, %v1251
    %v1266 = vpack.c.b16 %v1254, %v1253
    %v1267 = vpack.c.b16 %v1256, %v1255
    %v1268 = vpack.c.b16 %v1258, %v1257
    %v1269 = vpack.c.b16 %v1260, %v1259
    %v1270 = vpack.c.b16 %v1262, %v1261
    %1279 = vmatprep.subr.bf16.mxu0 0
    %1280 = vmatpush1.bf16.msra.mxu0 %v1263
    %1281 = vmatprep.subr.bf16.mxu0 0
    %1282 = vmatpush1.bf16.msra.mxu0 %v1264
    %1283 = vmatprep.subr.bf16.mxu0 0
    %1284 = vmatpush1.bf16.msra.mxu0 %v1265
    %1285 = vmatprep.subr.bf16.mxu0 0
    %1286 = vmatpush1.bf16.msra.mxu0 %v1266
    %1287 = vmatprep.subr.bf16.mxu0 0
    %1288 = vmatpush1.bf16.msra.mxu0 %v1267
    %1289 = vmatprep.subr.bf16.mxu0 0
    %1290 = vmatpush1.bf16.msra.mxu0 %v1268
    %1291 = vmatprep.subr.bf16.mxu0 0
    %1292 = vmatpush1.bf16.msra.mxu0 %v1269
    %1293 = vmatprep.subr.bf16.mxu0 0
    %1294 = vmatpush1.bf16.msra.mxu0 %v1270
    %1295 = vmatprep.subr.bf16.mxu0 0
    %1296 = vmatpush1.bf16.msra.mxu0 0
    %1297 = vmatprep.subr.bf16.mxu0 0
    %1298 = vmatpush1.bf16.msra.mxu0 0
    %1299 = vmatprep.subr.bf16.mxu0 0
    %1300 = vmatpush1.bf16.msra.mxu0 0
    %1301 = vmatprep.subr.bf16.mxu0 0
    %1302 = vmatpush1.bf16.msra.mxu0 0
    %1303 = vmatprep.subr.bf16.mxu0 0
    %1304 = vmatpush1.bf16.msra.mxu0 0
    %1305 = vmatprep.subr.bf16.mxu0 0
    %1306 = vmatpush1.bf16.msra.mxu0 0
    %1307 = vmatprep.subr.bf16.mxu0 0
    %1308 = vmatpush1.bf16.msra.mxu0 0
    %1309 = vmatprep.subr.bf16.mxu0 0
    %1310 = vmatpush1.bf16.msra.mxu0 0
    %1311 = vmatprep.mubr.bf16.mxu0 0
    %1312 = vmatmul.mubr.bf16.gmra.mrb[0].mxu0 %v1198
    %v1313 = vpop.f32.mrb[0].mxu0
    %v1314 = vadd.f32 0.0, %v1313
    %v1315 = vpop.f32.mrb[0].mxu0
    %v1316 = vpop.f32.mrb[0].mxu0
    %v1317 = vadd.f32 0.0, %v1316
    %v1318 = vpop.f32.mrb[0].mxu0
    %1319 = vmatprep.mubr.bf16.mxu0 0
    %1320 = vmatmul.mubr.bf16.gmra.mrb[0].mxu0 %v1199
    %v1321 = vpop.f32.mrb[0].mxu0
    %v1322 = vadd.f32 0.0, %v1321
    %v1323 = vpop.f32.mrb[0].mxu0
    %v1324 = vpop.f32.mrb[0].mxu0
    %v1325 = vadd.f32 0.0, %v1324
    %v1326 = vpop.f32.mrb[0].mxu0
    %1327 = vmatprep.mubr.bf16.mxu0 0
    %1328 = vmatmul.mubr.bf16.gmra.mrb[0].mxu0 %v1200
    %v1329 = vpop.f32.mrb[0].mxu0
    %v1330 = vadd.f32 0.0, %v1329
    %v1331 = vpop.f32.mrb[0].mxu0
    %v1332 = vpop.f32.mrb[0].mxu0
    %v1333 = vadd.f32 0.0, %v1332
    %v1334 = vpop.f32.mrb[0].mxu0
    %1335 = vmatprep.mubr.bf16.mxu0 0
    %1336 = vmatmul.mubr.bf16.gmra.mrb[0].mxu0 %v1201
    %v1337 = vpop.f32.mrb[0].mxu0
    %v1338 = vadd.f32 0.0, %v1337
    %v1339 = vpop.f32.mrb[0].mxu0
    %v1340 = vpop.f32.mrb[0].mxu0
    %v1341 = vadd.f32 0.0, %v1340
    %v1342 = vpop.f32.mrb[0].mxu0
    %1343 = vmatprep.mubr.bf16.mxu0 0
    %1344 = vmatmul.mubr.bf16.gmra.mrb[0].mxu0 %v1202
    %v1345 = vpop.f32.mrb[0].mxu0
    %v1346 = vadd.f32 0.0, %v1345
    %v1347 = vpop.f32.mrb[0].mxu0
    %v1348 = vpop.f32.mrb[0].mxu0
    %v1349 = vadd.f32 0.0, %v1348
    %v1350 = vpop.f32.mrb[0].mxu0
    %1351 = vmatprep.mubr.bf16.mxu0 0
    %1352 = vmatmul.mubr.bf16.gmra.mrb[0].mxu0 %v1203
    %v1353 = vpop.f32.mrb[0].mxu0
    %v1354 = vadd.f32 0.0, %v1353
    %v1355 = vpop.f32.mrb[0].mxu0
    %v1356 = vpop.f32.mrb[0].mxu0
    %v1357 = vadd.f32 0.0, %v1356
    %v1358 = vpop.f32.mrb[0].mxu0
    %1359 = vmatprep.mubr.bf16.mxu0 0
    %1360 = vmatmul.mubr.bf16.gmra.mrb[0].mxu0 %v1204
    %v1361 = vpop.f32.mrb[0].mxu0
    %v1362 = vadd.f32 0.0, %v1361
    %v1363 = vpop.f32.mrb[0].mxu0
    %v1364 = vpop.f32.mrb[0].mxu0
    %v1365 = vadd.f32 0.0, %v1364
    %v1366 = vpop.f32.mrb[0].mxu0
    %1367 = vmatprep.mubr.bf16.mxu0 0
    %1368 = vmatmul.mubr.bf16.gmra.mrb[0].mxu0 %v1205
    %v1369 = vpop.f32.mrb[0].mxu0
    %v1370 = vadd.f32 0.0, %v1369
    %v1371 = vpop.f32.mrb[0].mxu0
    %v1372 = vpop.f32.mrb[0].mxu0
    %v1373 = vadd.f32 0.0, %v1372
    %v1374 = vpop.f32.mrb[0].mxu0
    %1375 = vmatprep.mubr.bf16.mxu0 0
    %1376 = vmatmul.mubr.bf16.gmra.mrb[0].mxu0 %v1206
    %v1377 = vpop.f32.mrb[0].mxu0
    %v1378 = vadd.f32 0.0, %v1377
    %v1379 = vpop.f32.mrb[0].mxu0
    %v1380 = vpop.f32.mrb[0].mxu0
    %v1381 = vadd.f32 0.0, %v1380
    %v1382 = vpop.f32.mrb[0].mxu0
    %1383 = vmatprep.mubr.bf16.mxu0 0
    %1384 = vmatmul.mubr.bf16.gmra.mrb[0].mxu0 %v1207
    %v1385 = vpop.f32.mrb[0].mxu0
    %v1386 = vadd.f32 0.0, %v1385
    %v1387 = vpop.f32.mrb[0].mxu0
    %v1388 = vpop.f32.mrb[0].mxu0
    %v1389 = vadd.f32 0.0, %v1388
    %v1390 = vpop.f32.mrb[0].mxu0
    %1391 = vmatprep.mubr.bf16.mxu0 0
    %1392 = vmatmul.mubr.bf16.gmra.mrb[0].mxu0 %v1208
    %v1393 = vpop.f32.mrb[0].mxu0
    %v1394 = vadd.f32 0.0, %v1393
    %v1395 = vpop.f32.mrb[0].mxu0
    %v1396 = vpop.f32.mrb[0].mxu0
    %v1397 = vadd.f32 0.0, %v1396
    %v1398 = vpop.f32.mrb[0].mxu0
    %1399 = vmatprep.mubr.bf16.mxu0 0
    %1400 = vmatmul.mubr.bf16.gmra.mrb[0].mxu0 %v1209
    %v1401 = vpop.f32.mrb[0].mxu0
    %v1402 = vadd.f32 0.0, %v1401
    %v1403 = vpop.f32.mrb[0].mxu0
    %v1404 = vpop.f32.mrb[0].mxu0
    %v1405 = vadd.f32 0.0, %v1404
    %v1406 = vpop.f32.mrb[0].mxu0
    %1407 = vmatprep.mubr.bf16.mxu0 0
    %1408 = vmatmul.mubr.bf16.gmra.mrb[0].mxu0 %v1210
    %v1409 = vpop.f32.mrb[0].mxu0
    %v1410 = vadd.f32 0.0, %v1409
    %v1411 = vpop.f32.mrb[0].mxu0
    %v1412 = vpop.f32.mrb[0].mxu0
    %v1413 = vadd.f32 0.0, %v1412
    %v1414 = vpop.f32.mrb[0].mxu0
    %1415 = vmatprep.mubr.bf16.mxu0 0
    %1416 = vmatmul.mubr.bf16.gmra.mrb[0].mxu0 %v1211
    %v1417 = vpop.f32.mrb[0].mxu0
    %v1418 = vadd.f32 0.0, %v1417
    %v1419 = vpop.f32.mrb[0].mxu0
    %v1420 = vpop.f32.mrb[0].mxu0
    %v1421 = vadd.f32 0.0, %v1420
    %v1422 = vpop.f32.mrb[0].mxu0
    %1423 = vmatprep.mubr.bf16.mxu0 0
    %1424 = vmatmul.mubr.bf16.gmra.mrb[0].mxu0 %v1212
    %v1425 = vpop.f32.mrb[0].mxu0
    %v1426 = vadd.f32 0.0, %v1425
    %v1427 = vpop.f32.mrb[0].mxu0
    %v1428 = vpop.f32.mrb[0].mxu0
    %v1429 = vadd.f32 0.0, %v1428
    %v1430 = vpop.f32.mrb[0].mxu0
    %1431 = vmatprep.mubr.bf16.mxu0 0
    %1432 = vmatmul.mubr.bf16.gmra.mrb[0].mxu0 %v1213
    %v1433 = vpop.f32.mrb[0].mxu0
    %v1434 = vadd.f32 0.0, %v1433
    %v1435 = vpop.f32.mrb[0].mxu0
    %v1436 = vpop.f32.mrb[0].mxu0
    %v1437 = vadd.f32 0.0, %v1436
    %v1438 = vpop.f32.mrb[0].mxu0
    %1439 = vdwg.mxu0
    %v1440 = vmul.f32 %v1314, %v1314
    %v1441 = vmul.f32 %v1317, %v1317
    %v1442 = vmul.f32 %v1322, %v1322
    %v1443 = vmul.f32 %v1325, %v1325
    %v1444 = vmul.f32 %v1330, %v1330
    %v1445 = vmul.f32 %v1333, %v1333
    %v1446 = vmul.f32 %v1338, %v1338
    %v1447 = vmul.f32 %v1341, %v1341
    %v1448 = vmul.f32 %v1346, %v1346
    %v1449 = vmul.f32 %v1349, %v1349
    %v1450 = vmul.f32 %v1354, %v1354
    %v1451 = vmul.f32 %v1357, %v1357
    %v1452 = vmul.f32 %v1362, %v1362
    %v1453 = vmul.f32 %v1365, %v1365
    %v1454 = vmul.f32 %v1370, %v1370
    %v1455 = vmul.f32 %v1373, %v1373
    %v1456 = vmul.f32 %v1378, %v1378
    %v1457 = vmul.f32 %v1381, %v1381
    %v1458 = vmul.f32 %v1386, %v1386
    %v1459 = vmul.f32 %v1389, %v1389
    %v1460 = vmul.f32 %v1394, %v1394
    %v1461 = vmul.f32 %v1397, %v1397
    %v1462 = vmul.f32 %v1402, %v1402
    %v1463 = vmul.f32 %v1405, %v1405
    %v1464 = vmul.f32 %v1410, %v1410
    %v1465 = vmul.f32 %v1413, %v1413
    %v1466 = vmul.f32 %v1418, %v1418
    %v1467 = vmul.f32 %v1421, %v1421
    %v1468 = vmul.f32 %v1426, %v1426
    %v1469 = vmul.f32 %v1429, %v1429
    %v1470 = vmul.f32 %v1434, %v1434
    %v1471 = vmul.f32 %v1437, %v1437
    %1472 = vmatprep.subr.mxu0 %v1440
    %1473 = vmatpush1.msra.mxu0 %v1314
    %1474 = vmatprep.subr.mxu0 %v1441
    %1475 = vmatpush1.msra.mxu0 %v1317
    %1476 = vmatprep.subr.mxu0 %v1442
    %1477 = vmatpush1.msra.mxu0 %v1322
    %1478 = vmatprep.subr.mxu0 %v1443
    %1479 = vmatpush1.msra.mxu0 %v1325
    %1480 = vmatprep.subr.mxu0 %v1444
    %1481 = vmatpush1.msra.mxu0 %v1330
    %1482 = vmatprep.subr.mxu0 %v1445
    %1483 = vmatpush1.msra.mxu0 %v1333
    %1484 = vmatprep.subr.mxu0 %v1446
    %1485 = vmatpush1.msra.mxu0 %v1338
    %1486 = vmatprep.subr.mxu0 %v1447
    %1487 = vmatpush1.msra.mxu0 %v1341
    %1488 = vmatprep.subr.mxu0 %v1448
    %1489 = vmatpush1.msra.mxu0 %v1346
    %1490 = vmatprep.subr.mxu0 %v1449
    %1491 = vmatpush1.msra.mxu0 %v1349
    %1492 = vmatprep.subr.mxu0 %v1450
    %1493 = vmatpush1.msra.mxu0 %v1354
    %1494 = vmatprep.subr.mxu0 %v1451
    %1495 = vmatpush1.msra.mxu0 %v1357
    %1496 = vmatprep.subr.mxu0 %v1452
    %1497 = vmatpush1.msra.mxu0 %v1362
    %1498 = vmatprep.subr.mxu0 %v1453
    %1499 = vmatpush1.msra.mxu0 %v1365
    %1500 = vmatprep.subr.mxu0 %v1454
    %1501 = vmatpush1.msra.mxu0 %v1370
    %1502 = vmatprep.subr.mxu0 %v1455
    %1503 = vmatpush1.msra.mxu0 %v1373
    %1504 = vmatprep.subr.mxu0 %v1456
    %1505 = vmatpush1.msra.mxu0 %v1378
    %1506 = vmatprep.subr.mxu0 %v1457
    %1507 = vmatpush1.msra.mxu0 %v1381
    %1508 = vmatprep.subr.mxu0 %v1458
    %1509 = vmatpush1.msra.mxu0 %v1386
    %1510 = vmatprep.subr.mxu0 %v1459
    %1511 = vmatpush1.msra.mxu0 %v1389
    %1512 = vmatprep.subr.mxu0 %v1460
    %1513 = vmatpush1.msra.mxu0 %v1394
    %1514 = vmatprep.subr.mxu0 %v1461
    %1515 = vmatpush1.msra.mxu0 %v1397
    %1516 = vmatprep.subr.mxu0 %v1462
    %1517 = vmatpush1.msra.mxu0 %v1402
    %1518 = vmatprep.subr.mxu0 %v1463
    %1519 = vmatpush1.msra.mxu0 %v1405
    %1520 = vmatprep.subr.mxu0 %v1464
    %1521 = vmatpush1.msra.mxu0 %v1410
    %1522 = vmatprep.subr.mxu0 %v1465
    %1523 = vmatpush1.msra.mxu0 %v1413
    %1524 = vmatprep.subr.mxu0 %v1466
    %1525 = vmatpush1.msra.mxu0 %v1418
    %1526 = vmatprep.subr.mxu0 %v1467
    %1527 = vmatpush1.msra.mxu0 %v1421
    %1528 = vmatprep.subr.mxu0 %v1468
    %1529 = vmatpush1.msra.mxu0 %v1426
    %1530 = vmatprep.subr.mxu0 %v1469
    %1531 = vmatpush1.msra.mxu0 %v1429
    %1532 = vmatprep.subr.mxu0 %v1470
    %1533 = vmatpush1.msra.mxu0 %v1434
    %1534 = vmatprep.subr.mxu0 %v1471
    %1535 = vmatpush1.msra.mxu0 %v1437
    %1536 = vmatprep.mubr.f32.mxu0 0.00390625
    %1537 = vmatmul.mubr.f32.gmra.mrb[0].mxu0 0.00390625
    %v1538 = vpop.f32.mrb[0].mxu0
    %v1539 = vadd.f32 0.0, %v1538
    %v1540 = vpop.f32.mrb[0].mxu0
    %v1541 = vadd.f32 0.0, %v1540
    %1542 = vdwg.mxu0
    %v1543 = vmul.f32 %v1539, %v1539
    %v1544 = vsub.f32 %v1541, %v1543
    %v1545 = vadd.f32 %v1544, 1e-05
    %v1546 = vrsqrt.pop %v1545
    %v1548 = vrot.slane %v1546, 4
    %v1550 = vmul.f32 %v87, %v1548
    %v1551 = vlaneseq
    %v1552 = vshrl.u32 %v1551, 7
    %v1553 = vsub.s32 0, %v1552
    %v1554 = vrot.slane %v1539, %v1553
    %v1555 = vsub.f32 %v1314, %v1554
    %v1556 = vsub.f32 %v1317, %v1554
    %v1557 = vsub.f32 %v1322, %v1554
    %v1558 = vsub.f32 %v1325, %v1554
    %v1559 = vsub.f32 %v1330, %v1554
    %v1560 = vsub.f32 %v1333, %v1554
    %v1561 = vsub.f32 %v1338, %v1554
    %v1562 = vsub.f32 %v1341, %v1554
    %v1563 = vsub.f32 %v1346, %v1554
    %v1564 = vsub.f32 %v1349, %v1554
    %v1565 = vsub.f32 %v1354, %v1554
    %v1566 = vsub.f32 %v1357, %v1554
    %v1567 = vsub.f32 %v1362, %v1554
    %v1568 = vsub.f32 %v1365, %v1554
    %v1569 = vsub.f32 %v1370, %v1554
    %v1570 = vsub.f32 %v1373, %v1554
    %v1571 = vsub.f32 %v1378, %v1554
    %v1572 = vsub.f32 %v1381, %v1554
    %v1573 = vsub.f32 %v1386, %v1554
    %v1574 = vsub.f32 %v1389, %v1554
    %v1575 = vsub.f32 %v1394, %v1554
    %v1576 = vsub.f32 %v1397, %v1554
    %v1577 = vsub.f32 %v1402, %v1554
    %v1578 = vsub.f32 %v1405, %v1554
    %v1579 = vsub.f32 %v1410, %v1554
    %v1580 = vsub.f32 %v1413, %v1554
    %v1581 = vsub.f32 %v1418, %v1554
    %v1582 = vsub.f32 %v1421, %v1554
    %v1583 = vsub.f32 %v1426, %v1554
    %v1584 = vsub.f32 %v1429, %v1554
    %v1585 = vsub.f32 %v1434, %v1554
    %v1586 = vsub.f32 %v1437, %v1554
    %v1587 = vlaneseq
    %v1588 = vshrl.u32 %v1587, 7
    %v1589 = vsub.s32 4, %v1588
    %v1590 = vrot.slane %v1550, %v1589
    %v1591 = vmul.f32 %v1555, %v1590
    %v1592 = vmul.f32 %v1556, %v1590
    %v1593 = vmul.f32 %v1557, %v1590
    %v1594 = vmul.f32 %v1558, %v1590
    %v1595 = vmul.f32 %v1559, %v1590
    %v1596 = vmul.f32 %v1560, %v1590
    %v1597 = vmul.f32 %v1561, %v1590
    %v1598 = vmul.f32 %v1562, %v1590
    %v1599 = vmul.f32 %v1563, %v1590
    %v1600 = vmul.f32 %v1564, %v1590
    %v1601 = vmul.f32 %v1565, %v1590
    %v1602 = vmul.f32 %v1566, %v1590
    %v1603 = vmul.f32 %v1567, %v1590
    %v1604 = vmul.f32 %v1568, %v1590
    %v1605 = vmul.f32 %v1569, %v1590
    %v1606 = vmul.f32 %v1570, %v1590
    %v1607 = vmul.f32 %v1571, %v1590
    %v1608 = vmul.f32 %v1572, %v1590
    %v1609 = vmul.f32 %v1573, %v1590
    %v1610 = vmul.f32 %v1574, %v1590
    %v1611 = vmul.f32 %v1575, %v1590
    %v1612 = vmul.f32 %v1576, %v1590
    %v1613 = vmul.f32 %v1577, %v1590
    %v1614 = vmul.f32 %v1578, %v1590
    %v1615 = vmul.f32 %v1579, %v1590
    %v1616 = vmul.f32 %v1580, %v1590
    %v1617 = vmul.f32 %v1581, %v1590
    %v1618 = vmul.f32 %v1582, %v1590
    %v1619 = vmul.f32 %v1583, %v1590
    %v1620 = vmul.f32 %v1584, %v1590
    %v1621 = vmul.f32 %v1585, %v1590
    %v1622 = vmul.f32 %v1586, %v1590
    %v1623 = vlaneseq
    %v1624 = vshrl.u32 %v1623, 7
    %v1625 = vsub.s32 5, %v1624
    %v1626 = vrot.slane %v87, %v1625
    %v1627 = vadd.f32 %v1591, %v1626
    %v1628 = vadd.f32 %v1592, %v1626
    %v1629 = vadd.f32 %v1593, %v1626
    %v1630 = vadd.f32 %v1594, %v1626
    %v1631 = vadd.f32 %v1595, %v1626
    %v1632 = vadd.f32 %v1596, %v1626
    %v1633 = vadd.f32 %v1597, %v1626
    %v1634 = vadd.f32 %v1598, %v1626
    %v1635 = vadd.f32 %v1599, %v1626
    %v1636 = vadd.f32 %v1600, %v1626
    %v1637 = vadd.f32 %v1601, %v1626
    %v1638 = vadd.f32 %v1602, %v1626
    %v1639 = vadd.f32 %v1603, %v1626
    %v1640 = vadd.f32 %v1604, %v1626
    %v1641 = vadd.f32 %v1605, %v1626
    %v1642 = vadd.f32 %v1606, %v1626
    %v1643 = vadd.f32 %v1607, %v1626
    %v1644 = vadd.f32 %v1608, %v1626
    %v1645 = vadd.f32 %v1609, %v1626
    %v1646 = vadd.f32 %v1610, %v1626
    %v1647 = vadd.f32 %v1611, %v1626
    %v1648 = vadd.f32 %v1612, %v1626
    %v1649 = vadd.f32 %v1613, %v1626
    %v1650 = vadd.f32 %v1614, %v1626
    %v1651 = vadd.f32 %v1615, %v1626
    %v1652 = vadd.f32 %v1616, %v1626
    %v1653 = vadd.f32 %v1617, %v1626
    %v1654 = vadd.f32 %v1618, %v1626
    %v1655 = vadd.f32 %v1619, %v1626
    %v1656 = vadd.f32 %v1620, %v1626
    %v1657 = vadd.f32 %v1621, %v1626
    %v1658 = vadd.f32 %v1622, %v1626
    %vm1659 = vcmp.gt.f32.partialorder %v1627, 0.0
    %vm1660 = vcmp.gt.f32.partialorder %v1628, 0.0
    %vm1661 = vcmp.gt.f32.partialorder %v1629, 0.0
    %vm1662 = vcmp.gt.f32.partialorder %v1630, 0.0
    %vm1663 = vcmp.gt.f32.partialorder %v1631, 0.0
    %vm1664 = vcmp.gt.f32.partialorder %v1632, 0.0
    %vm1665 = vcmp.gt.f32.partialorder %v1633, 0.0
    %vm1666 = vcmp.gt.f32.partialorder %v1634, 0.0
    %vm1667 = vcmp.gt.f32.partialorder %v1635, 0.0
    %vm1668 = vcmp.gt.f32.partialorder %v1636, 0.0
    %vm1669 = vcmp.gt.f32.partialorder %v1637, 0.0
    %vm1670 = vcmp.gt.f32.partialorder %v1638, 0.0
    %vm1671 = vcmp.gt.f32.partialorder %v1639, 0.0
    %vm1672 = vcmp.gt.f32.partialorder %v1640, 0.0
    %vm1673 = vcmp.gt.f32.partialorder %v1641, 0.0
    %vm1674 = vcmp.gt.f32.partialorder %v1642, 0.0
    %vm1675 = vcmp.gt.f32.partialorder %v1643, 0.0
    %vm1676 = vcmp.gt.f32.partialorder %v1644, 0.0
    %vm1677 = vcmp.gt.f32.partialorder %v1645, 0.0
    %vm1678 = vcmp.gt.f32.partialorder %v1646, 0.0
    %vm1679 = vcmp.gt.f32.partialorder %v1647, 0.0
    %vm1680 = vcmp.gt.f32.partialorder %v1648, 0.0
    %vm1681 = vcmp.gt.f32.partialorder %v1649, 0.0
    %vm1682 = vcmp.gt.f32.partialorder %v1650, 0.0
    %vm1683 = vcmp.gt.f32.partialorder %v1651, 0.0
    %vm1684 = vcmp.gt.f32.partialorder %v1652, 0.0
    %vm1685 = vcmp.gt.f32.partialorder %v1653, 0.0
    %vm1686 = vcmp.gt.f32.partialorder %v1654, 0.0
    %vm1687 = vcmp.gt.f32.partialorder %v1655, 0.0
    %vm1688 = vcmp.gt.f32.partialorder %v1656, 0.0
    %vm1689 = vcmp.gt.f32.partialorder %v1657, 0.0
    %vm1690 = vcmp.gt.f32.partialorder %v1658, 0.0
    %v1691 = vmul.f32 %v1627, 0.2
    %v1692 = vmul.f32 %v1628, 0.2
    %v1693 = vmul.f32 %v1629, 0.2
    %v1694 = vmul.f32 %v1630, 0.2
    %v1695 = vmul.f32 %v1631, 0.2
    %v1696 = vmul.f32 %v1632, 0.2
    %v1697 = vmul.f32 %v1633, 0.2
    %v1698 = vmul.f32 %v1634, 0.2
    %v1699 = vmul.f32 %v1635, 0.2
    %v1700 = vmul.f32 %v1636, 0.2
    %v1701 = vmul.f32 %v1637, 0.2
    %v1702 = vmul.f32 %v1638, 0.2
    %v1703 = vmul.f32 %v1639, 0.2
    %v1704 = vmul.f32 %v1640, 0.2
    %v1705 = vmul.f32 %v1641, 0.2
    %v1706 = vmul.f32 %v1642, 0.2
    %v1707 = vmul.f32 %v1643, 0.2
    %v1708 = vmul.f32 %v1644, 0.2
    %v1709 = vmul.f32 %v1645, 0.2
    %v1710 = vmul.f32 %v1646, 0.2
    %v1711 = vmul.f32 %v1647, 0.2
    %v1712 = vmul.f32 %v1648, 0.2
    %v1713 = vmul.f32 %v1649, 0.2
    %v1714 = vmul.f32 %v1650, 0.2
    %v1715 = vmul.f32 %v1651, 0.2
    %v1716 = vmul.f32 %v1652, 0.2
    %v1717 = vmul.f32 %v1653, 0.2
    %v1718 = vmul.f32 %v1654, 0.2
    %v1719 = vmul.f32 %v1655, 0.2
    %v1720 = vmul.f32 %v1656, 0.2
    %v1721 = vmul.f32 %v1657, 0.2
    %v1722 = vmul.f32 %v1658, 0.2
    %v1723 = vsel %vm1659, %v1627, %v1691
    %v1724 = vsel %vm1660, %v1628, %v1692
    %v1725 = vsel %vm1661, %v1629, %v1693
    %v1726 = vsel %vm1662, %v1630, %v1694
    %v1727 = vsel %vm1663, %v1631, %v1695
    %v1728 = vsel %vm1664, %v1632, %v1696
    %v1729 = vsel %vm1665, %v1633, %v1697
    %v1730 = vsel %vm1666, %v1634, %v1698
    %v1731 = vsel %vm1667, %v1635, %v1699
    %v1732 = vsel %vm1668, %v1636, %v1700
    %v1733 = vsel %vm1669, %v1637, %v1701
    %v1734 = vsel %vm1670, %v1638, %v1702
    %v1735 = vsel %vm1671, %v1639, %v1703
    %v1736 = vsel %vm1672, %v1640, %v1704
    %v1737 = vsel %vm1673, %v1641, %v1705
    %v1738 = vsel %vm1674, %v1642, %v1706
    %v1739 = vsel %vm1675, %v1643, %v1707
    %v1740 = vsel %vm1676, %v1644, %v1708
    %v1741 = vsel %vm1677, %v1645, %v1709
    %v1742 = vsel %vm1678, %v1646, %v1710
    %v1743 = vsel %vm1679, %v1647, %v1711
    %v1744 = vsel %vm1680, %v1648, %v1712
    %v1745 = vsel %vm1681, %v1649, %v1713
    %v1746 = vsel %vm1682, %v1650, %v1714
    %v1747 = vsel %vm1683, %v1651, %v1715
    %v1748 = vsel %vm1684, %v1652, %v1716
    %v1749 = vsel %vm1685, %v1653, %v1717
    %v1750 = vsel %vm1686, %v1654, %v1718
    %v1751 = vsel %vm1687, %v1655, %v1719
    %v1752 = vsel %vm1688, %v1656, %v1720
    %v1753 = vsel %vm1689, %v1657, %v1721
    %v1754 = vsel %vm1690, %v1658, %v1722
    %v1755 = vpack.c.bf16 %v1724, %v1723
    %v1756 = vpack.c.bf16 %v1726, %v1725
    %v1757 = vpack.c.bf16 %v1728, %v1727
    %v1758 = vpack.c.bf16 %v1730, %v1729
    %v1759 = vpack.c.bf16 %v1732, %v1731
    %v1760 = vpack.c.bf16 %v1734, %v1733
    %v1761 = vpack.c.bf16 %v1736, %v1735
    %v1762 = vpack.c.bf16 %v1738, %v1737
    %v1763 = vpack.c.bf16 %v1740, %v1739
    %v1764 = vpack.c.bf16 %v1742, %v1741
    %v1765 = vpack.c.bf16 %v1744, %v1743
    %v1766 = vpack.c.bf16 %v1746, %v1745
    %v1767 = vpack.c.bf16 %v1748, %v1747
    %v1768 = vpack.c.bf16 %v1750, %v1749
    %v1769 = vpack.c.bf16 %v1752, %v1751
    %v1770 = vpack.c.bf16 %v1754, %v1753
    %s1771 = scalar_lea.vmem [#allocation5], 192
    %v1772 = vld [vmem:[%s1771] sm:$0xf]
    %v1773 = vld [vmem:[%s1771 + $0x4] sm:$0xf]
    %v1774 = vld [vmem:[%s1771 + $0x8] sm:$0xf]
    %v1775 = vld [vmem:[%s1771 + $0xc] sm:$0xf]
    %v1776 = vld [vmem:[%s1771 + $0x10] sm:$0xf]
    %v1777 = vld [vmem:[%s1771 + $0x14] sm:$0xf]
    %v1778 = vld [vmem:[%s1771 + $0x18] sm:$0xf]
    %v1779 = vld [vmem:[%s1771 + $0x1c] sm:$0xf]
    %v1780 = vld [vmem:[%s1771 + $0x20] sm:$0xf]
    %v1781 = vld [vmem:[%s1771 + $0x24] sm:$0xf]
    %v1782 = vld [vmem:[%s1771 + $0x28] sm:$0xf]
    %v1783 = vld [vmem:[%s1771 + $0x2c] sm:$0xf]
    %v1784 = vld [vmem:[%s1771 + $0x30] sm:$0xf]
    %v1785 = vld [vmem:[%s1771 + $0x34] sm:$0xf]
    %v1786 = vld [vmem:[%s1771 + $0x38] sm:$0xf]
    %v1787 = vld [vmem:[%s1771 + $0x3c] sm:$0xf]
    %v1788 = vlaneseq
    %v1789 = vshrl.u32 %v1788, 7
    %v1790 = vsub.s32 6, %v1789
    %v1791 = vrot.slane %v87, %v1790
    %v1808 = vunpack.c.l.b16 %v1772
    %v1809 = vunpack.c.l.b16 %v1773
    %v1810 = vunpack.c.l.b16 %v1774
    %v1811 = vunpack.c.l.b16 %v1775
    %v1812 = vunpack.c.l.b16 %v1776
    %v1813 = vunpack.c.l.b16 %v1777
    %v1814 = vunpack.c.l.b16 %v1778
    %v1815 = vunpack.c.l.b16 %v1779
    %v1816 = vunpack.c.l.b16 %v1780
    %v1817 = vunpack.c.l.b16 %v1781
    %v1818 = vunpack.c.l.b16 %v1782
    %v1819 = vunpack.c.l.b16 %v1783
    %v1820 = vunpack.c.l.b16 %v1784
    %v1821 = vunpack.c.l.b16 %v1785
    %v1822 = vunpack.c.l.b16 %v1786
    %v1823 = vunpack.c.l.b16 %v1787
    %v1824 = vpack.c.b16 %v1809, %v1808
    %v1825 = vpack.c.b16 %v1811, %v1810
    %v1826 = vpack.c.b16 %v1813, %v1812
    %v1827 = vpack.c.b16 %v1815, %v1814
    %v1828 = vpack.c.b16 %v1817, %v1816
    %v1829 = vpack.c.b16 %v1819, %v1818
    %v1830 = vpack.c.b16 %v1821, %v1820
    %v1831 = vpack.c.b16 %v1823, %v1822
    %1840 = vmatprep.subr.bf16.mxu0 0
    %1841 = vmatpush1.bf16.msra.mxu0 %v1824
    %1842 = vmatprep.subr.bf16.mxu0 0
    %1843 = vmatpush1.bf16.msra.mxu0 %v1825
    %1844 = vmatprep.subr.bf16.mxu0 0
    %1845 = vmatpush1.bf16.msra.mxu0 %v1826
    %1846 = vmatprep.subr.bf16.mxu0 0
    %1847 = vmatpush1.bf16.msra.mxu0 %v1827
    %1848 = vmatprep.subr.bf16.mxu0 0
    %1849 = vmatpush1.bf16.msra.mxu0 %v1828
    %1850 = vmatprep.subr.bf16.mxu0 0
    %1851 = vmatpush1.bf16.msra.mxu0 %v1829
    %1852 = vmatprep.subr.bf16.mxu0 0
    %1853 = vmatpush1.bf16.msra.mxu0 %v1830
    %1854 = vmatprep.subr.bf16.mxu0 0
    %1855 = vmatpush1.bf16.msra.mxu0 %v1831
    %1856 = vmatprep.subr.bf16.mxu0 0
    %1857 = vmatpush1.bf16.msra.mxu0 0
    %1858 = vmatprep.subr.bf16.mxu0 0
    %1859 = vmatpush1.bf16.msra.mxu0 0
    %1860 = vmatprep.subr.bf16.mxu0 0
    %1861 = vmatpush1.bf16.msra.mxu0 0
    %1862 = vmatprep.subr.bf16.mxu0 0
    %1863 = vmatpush1.bf16.msra.mxu0 0
    %1864 = vmatprep.subr.bf16.mxu0 0
    %1865 = vmatpush1.bf16.msra.mxu0 0
    %1866 = vmatprep.subr.bf16.mxu0 0
    %1867 = vmatpush1.bf16.msra.mxu0 0
    %1868 = vmatprep.subr.bf16.mxu0 0
    %1869 = vmatpush1.bf16.msra.mxu0 0
    %1870 = vmatprep.subr.bf16.mxu0 0
    %1871 = vmatpush1.bf16.msra.mxu0 0
    %1872 = vmatprep.mubr.bf16.mxu0 0
    %1873 = vmatmul.mubr.bf16.gmra.mrb[0].mxu0 %v1755
    %v1874 = vpop.f32.mrb[0].mxu0
    %v1875 = vadd.f32 %v1791, %v1874
    %v1876 = vpop.f32.mrb[0].mxu0
    %v1877 = vpop.f32.mrb[0].mxu0
    %v1878 = vadd.f32 %v1791, %v1877
    %v1879 = vpop.f32.mrb[0].mxu0
    %1880 = vmatprep.mubr.bf16.mxu0 0
    %1881 = vmatmul.mubr.bf16.gmra.mrb[0].mxu0 %v1756
    %v1882 = vpop.f32.mrb[0].mxu0
    %v1883 = vadd.f32 %v1791, %v1882
    %v1884 = vpop.f32.mrb[0].mxu0
    %v1885 = vpop.f32.mrb[0].mxu0
    %v1886 = vadd.f32 %v1791, %v1885
    %v1887 = vpop.f32.mrb[0].mxu0
    %1888 = vmatprep.mubr.bf16.mxu0 0
    %1889 = vmatmul.mubr.bf16.gmra.mrb[0].mxu0 %v1757
    %v1890 = vpop.f32.mrb[0].mxu0
    %v1891 = vadd.f32 %v1791, %v1890
    %v1892 = vpop.f32.mrb[0].mxu0
    %v1893 = vpop.f32.mrb[0].mxu0
    %v1894 = vadd.f32 %v1791, %v1893
    %v1895 = vpop.f32.mrb[0].mxu0
    %1896 = vmatprep.mubr.bf16.mxu0 0
    %1897 = vmatmul.mubr.bf16.gmra.mrb[0].mxu0 %v1758
    %v1898 = vpop.f32.mrb[0].mxu0
    %v1899 = vadd.f32 %v1791, %v1898
    %v1900 = vpop.f32.mrb[0].mxu0
    %v1901 = vpop.f32.mrb[0].mxu0
    %v1902 = vadd.f32 %v1791, %v1901
    %v1903 = vpop.f32.mrb[0].mxu0
    %1904 = vmatprep.mubr.bf16.mxu0 0
    %1905 = vmatmul.mubr.bf16.gmra.mrb[0].mxu0 %v1759
    %v1906 = vpop.f32.mrb[0].mxu0
    %v1907 = vadd.f32 %v1791, %v1906
    %v1908 = vpop.f32.mrb[0].mxu0
    %v1909 = vpop.f32.mrb[0].mxu0
    %v1910 = vadd.f32 %v1791, %v1909
    %v1911 = vpop.f32.mrb[0].mxu0
    %1912 = vmatprep.mubr.bf16.mxu0 0
    %1913 = vmatmul.mubr.bf16.gmra.mrb[0].mxu0 %v1760
    %v1914 = vpop.f32.mrb[0].mxu0
    %v1915 = vadd.f32 %v1791, %v1914
    %v1916 = vpop.f32.mrb[0].mxu0
    %v1917 = vpop.f32.mrb[0].mxu0
    %v1918 = vadd.f32 %v1791, %v1917
    %v1919 = vpop.f32.mrb[0].mxu0
    %1920 = vmatprep.mubr.bf16.mxu0 0
    %1921 = vmatmul.mubr.bf16.gmra.mrb[0].mxu0 %v1761
    %v1922 = vpop.f32.mrb[0].mxu0
    %v1923 = vadd.f32 %v1791, %v1922
    %v1924 = vpop.f32.mrb[0].mxu0
    %v1925 = vpop.f32.mrb[0].mxu0
    %v1926 = vadd.f32 %v1791, %v1925
    %v1927 = vpop.f32.mrb[0].mxu0
    %1928 = vmatprep.mubr.bf16.mxu0 0
    %1929 = vmatmul.mubr.bf16.gmra.mrb[0].mxu0 %v1762
    %v1930 = vpop.f32.mrb[0].mxu0
    %v1931 = vadd.f32 %v1791, %v1930
    %v1932 = vpop.f32.mrb[0].mxu0
    %v1933 = vpop.f32.mrb[0].mxu0
    %v1934 = vadd.f32 %v1791, %v1933
    %v1935 = vpop.f32.mrb[0].mxu0
    %1936 = vmatprep.mubr.bf16.mxu0 0
    %1937 = vmatmul.mubr.bf16.gmra.mrb[0].mxu0 %v1763
    %v1938 = vpop.f32.mrb[0].mxu0
    %v1939 = vadd.f32 %v1791, %v1938
    %v1940 = vpop.f32.mrb[0].mxu0
    %v1941 = vpop.f32.mrb[0].mxu0
    %v1942 = vadd.f32 %v1791, %v1941
    %v1943 = vpop.f32.mrb[0].mxu0
    %1944 = vmatprep.mubr.bf16.mxu0 0
    %1945 = vmatmul.mubr.bf16.gmra.mrb[0].mxu0 %v1764
    %v1946 = vpop.f32.mrb[0].mxu0
    %v1947 = vadd.f32 %v1791, %v1946
    %v1948 = vpop.f32.mrb[0].mxu0
    %v1949 = vpop.f32.mrb[0].mxu0
    %v1950 = vadd.f32 %v1791, %v1949
    %v1951 = vpop.f32.mrb[0].mxu0
    %1952 = vmatprep.mubr.bf16.mxu0 0
    %1953 = vmatmul.mubr.bf16.gmra.mrb[0].mxu0 %v1765
    %v1954 = vpop.f32.mrb[0].mxu0
    %v1955 = vadd.f32 %v1791, %v1954
    %v1956 = vpop.f32.mrb[0].mxu0
    %v1957 = vpop.f32.mrb[0].mxu0
    %v1958 = vadd.f32 %v1791, %v1957
    %v1959 = vpop.f32.mrb[0].mxu0
    %1960 = vmatprep.mubr.bf16.mxu0 0
    %1961 = vmatmul.mubr.bf16.gmra.mrb[0].mxu0 %v1766
    %v1962 = vpop.f32.mrb[0].mxu0
    %v1963 = vadd.f32 %v1791, %v1962
    %v1964 = vpop.f32.mrb[0].mxu0
    %v1965 = vpop.f32.mrb[0].mxu0
    %v1966 = vadd.f32 %v1791, %v1965
    %v1967 = vpop.f32.mrb[0].mxu0
    %1968 = vmatprep.mubr.bf16.mxu0 0
    %1969 = vmatmul.mubr.bf16.gmra.mrb[0].mxu0 %v1767
    %v1970 = vpop.f32.mrb[0].mxu0
    %v1971 = vadd.f32 %v1791, %v1970
    %v1972 = vpop.f32.mrb[0].mxu0
    %v1973 = vpop.f32.mrb[0].mxu0
    %v1974 = vadd.f32 %v1791, %v1973
    %v1975 = vpop.f32.mrb[0].mxu0
    %1976 = vmatprep.mubr.bf16.mxu0 0
    %1977 = vmatmul.mubr.bf16.gmra.mrb[0].mxu0 %v1768
    %v1978 = vpop.f32.mrb[0].mxu0
    %v1979 = vadd.f32 %v1791, %v1978
    %v1980 = vpop.f32.mrb[0].mxu0
    %v1981 = vpop.f32.mrb[0].mxu0
    %v1982 = vadd.f32 %v1791, %v1981
    %v1983 = vpop.f32.mrb[0].mxu0
    %1984 = vmatprep.mubr.bf16.mxu0 0
    %1985 = vmatmul.mubr.bf16.gmra.mrb[0].mxu0 %v1769
    %v1986 = vpop.f32.mrb[0].mxu0
    %v1987 = vadd.f32 %v1791, %v1986
    %v1988 = vpop.f32.mrb[0].mxu0
    %v1989 = vpop.f32.mrb[0].mxu0
    %v1990 = vadd.f32 %v1791, %v1989
    %v1991 = vpop.f32.mrb[0].mxu0
    %1992 = vmatprep.mubr.bf16.mxu0 0
    %1993 = vmatmul.mubr.bf16.gmra.mrb[0].mxu0 %v1770
    %v1994 = vpop.f32.mrb[0].mxu0
    %v1995 = vadd.f32 %v1791, %v1994
    %v1996 = vpop.f32.mrb[0].mxu0
    %v1997 = vpop.f32.mrb[0].mxu0
    %v1998 = vadd.f32 %v1791, %v1997
    %v1999 = vpop.f32.mrb[0].mxu0
    %2000 = vdwg.mxu0
    %v2001 = vtanh.pop %v1875
    %v2002 = vtanh.pop %v1878
    %v2003 = vtanh.pop %v1883
    %v2004 = vtanh.pop %v1886
    %v2005 = vtanh.pop %v1891
    %v2006 = vtanh.pop %v1894
    %v2007 = vtanh.pop %v1899
    %v2008 = vtanh.pop %v1902
    %v2009 = vtanh.pop %v1907
    %v2010 = vtanh.pop %v1910
    %v2011 = vtanh.pop %v1915
    %v2012 = vtanh.pop %v1918
    %v2013 = vtanh.pop %v1923
    %v2014 = vtanh.pop %v1926
    %v2015 = vtanh.pop %v1931
    %v2016 = vtanh.pop %v1934
    %v2017 = vtanh.pop %v1939
    %v2018 = vtanh.pop %v1942
    %v2019 = vtanh.pop %v1947
    %v2020 = vtanh.pop %v1950
    %v2021 = vtanh.pop %v1955
    %v2022 = vtanh.pop %v1958
    %v2023 = vtanh.pop %v1963
    %v2024 = vtanh.pop %v1966
    %v2025 = vtanh.pop %v1971
    %v2026 = vtanh.pop %v1974
    %v2027 = vtanh.pop %v1979
    %v2028 = vtanh.pop %v1982
    %v2029 = vtanh.pop %v1987
    %v2030 = vtanh.pop %v1990
    %v2031 = vtanh.pop %v1995
    %v2032 = vtanh.pop %v1998
    %2033 = vst [vmem:[#allocation8] sm:$0xff] %v2001
    %2034 = vst [vmem:[#allocation8 + $0x8] sm:$0xff] %v2002
    %2035 = vst [vmem:[#allocation8 + $0x10] sm:$0xff] %v2003
    %2036 = vst [vmem:[#allocation8 + $0x18] sm:$0xff] %v2004
    %2037 = vst [vmem:[#allocation8 + $0x20] sm:$0xff] %v2005
    %2038 = vst [vmem:[#allocation8 + $0x28] sm:$0xff] %v2006
    %2039 = vst [vmem:[#allocation8 + $0x30] sm:$0xff] %v2007
    %2040 = vst [vmem:[#allocation8 + $0x38] sm:$0xff] %v2008
    %2041 = vst [vmem:[#allocation8 + $0x40] sm:$0xff] %v2009
    %2042 = vst [vmem:[#allocation8 + $0x48] sm:$0xff] %v2010
    %2043 = vst [vmem:[#allocation8 + $0x50] sm:$0xff] %v2011
    %2044 = vst [vmem:[#allocation8 + $0x58] sm:$0xff] %v2012
    %2045 = vst [vmem:[#allocation8 + $0x60] sm:$0xff] %v2013
    %2046 = vst [vmem:[#allocation8 + $0x68] sm:$0xff] %v2014
    %2047 = vst [vmem:[#allocation8 + $0x70] sm:$0xff] %v2015
    %2048 = vst [vmem:[#allocation8 + $0x78] sm:$0xff] %v2016
    %2049 = vst [vmem:[#allocation8 + $0x80] sm:$0xff] %v2017
    %2050 = vst [vmem:[#allocation8 + $0x88] sm:$0xff] %v2018
    %2051 = vst [vmem:[#allocation8 + $0x90] sm:$0xff] %v2019
    %2052 = vst [vmem:[#allocation8 + $0x98] sm:$0xff] %v2020
    %2053 = vst [vmem:[#allocation8 + $0xa0] sm:$0xff] %v2021
    %2054 = vst [vmem:[#allocation8 + $0xa8] sm:$0xff] %v2022
    %2055 = vst [vmem:[#allocation8 + $0xb0] sm:$0xff] %v2023
    %2056 = vst [vmem:[#allocation8 + $0xb8] sm:$0xff] %v2024
    %2057 = vst [vmem:[#allocation8 + $0xc0] sm:$0xff] %v2025
    %2058 = vst [vmem:[#allocation8 + $0xc8] sm:$0xff] %v2026
    %2059 = vst [vmem:[#allocation8 + $0xd0] sm:$0xff] %v2027
    %2060 = vst [vmem:[#allocation8 + $0xd8] sm:$0xff] %v2028
    %2061 = vst [vmem:[#allocation8 + $0xe0] sm:$0xff] %v2029
    %2062 = vst [vmem:[#allocation8 + $0xe8] sm:$0xff] %v2030
    %2063 = vst [vmem:[#allocation8 + $0xf0] sm:$0xff] %v2031
    %2064 = vst [vmem:[#allocation8 + $0xf8] sm:$0xff] %v2032
    // Predicated region
    $region26: #{generator_forward.1} parent=1 // pred_check
      _
    $region27: #{generator_forward.1} parent=1 // pred_check_branch
      %2066 = sbr.rel (0) target = $region29
    $region28: #{generator_forward.1} parent=1 // pred_region
      %s2068 = ssub.s32 4096, 4096
      %2069 = vsyncadd [#allocation4], %s2068
      %s2070 = sshll.u32 [#allocation8], 4
      %s2071 = int_to_ptr.vmem [resolvable:$true] %s2070
      %2076 = dma.vmem_to_hbm [thread:$0]  %s2071, 4096, %s3, [#allocation4], 128, 128, 8
    $region29: #{generator_forward.1} parent=1 // pred_fallthru
      _
    // Predicated region
    $region30: #{generator_forward.1} parent=1 // pred_check
      _
    $region31: #{generator_forward.1} parent=1 // pred_check_branch
      %2078 = sbr.rel (0) target = $region33
    $region32: #{generator_forward.1} parent=1 // pred_region
      %2079 = dma.done [#allocation4], 4096
    $region33: #{generator_forward.1} parent=1 // pred_fallthru
      _
    %2080 = vsyncpa [#allocation3], 1
    %2081 = vsyncpa [#allocation6], 1
    %2082 = vsyncpa [#allocation4], 1

</llo_original>
